<compile_context>
chip_gen: v7x
topology: tpu7x:2x2x1
jax: 0.10.0
libtpu: 0.0.40
codegen_flags: <defaults>
</compile_context>

<pallas_src>
import functools

import jax
import jax.numpy as jnp
from jax.experimental import pallas as pl
from jax.experimental.pallas import tpu as pltpu

HIDDEN = 32            # internal width of the point-wise MLP
H_AUG = HIDDEN + 1     # hidden + ones column (denominator accumulator)
OUT_CH = 15            # deep_opt['output_channel']
OUT_PAD = 128          # lane-dense padded output width (sliced back to 15)
IN_CH = 1              # deep_opt['input_channel']
AUG_CH = 8             # augmented coordinate width (5 used, padded to 8)
WEIGHT_FACTOR = 1000.0 # get_naive_lung_feature(weight_factor=1000)
SIGMA = 0.05           # isotropic point-conv kernel width (synthetic radius)
KSCALE = 0.5 / (SIGMA * SIGMA)


def _supports_bf16_eup():
    """bf16 transcendentals exist on v6e / v7x; stay f32 on v5e and older."""
    try:
        kind = jax.devices()[0].device_kind.lower()
    except Exception:
        return False
    return ("v6" in kind) or ("v7" in kind)


def _fea_kernel(qaug_ref, kaugT_ref, h1_ref, w2_ref, b2_ref, w3_ref, b3_ref,
                out_ref, acc_ref, *, exp_dtype):
    """Grid = (B, N//TQ, N//TK); key-reduction axis is last.

    qaug_ref  : (1, TQ, 8)        augmented query coords  [2x,2y,2z,-1,-|q|^2,0,0,0]
    kaugT_ref : (1, 8, TK)        augmented key coords^T  [x,y,z,|k|^2,1,0,0,0]^T
    h1_ref    : (1, TK, H_AUG)    bf16 precomputed layer-1 features + ones column
    w2/b2     : (H, H), (1, H)          1x1 conv H -> H
    w3/b3     : (H, OUT_PAD), (1, OUT_PAD)   1x1 conv H -> 15 (zero-padded)
    out_ref   : (1, TQ, OUT_PAD)
    acc_ref   : (TQ, H_AUG) f32 VMEM scratch; cols 0..H-1 numerator, col H denominator
    """
    k_idx = pl.program_id(2)

    @pl.when(k_idx == 0)
    def _():
        acc_ref[...] = jnp.zeros_like(acc_ref)

    # One MXU matmul produces -||q - k||^2 for the whole (TQ, TK) tile.
    neg_d2 = jnp.dot(qaug_ref[0], kaugT_ref[0],
                     preferred_element_type=jnp.float32)          # (TQ, TK)
    # Scale on the VPU (free filler under the EUP-bound exp); exp in bf16 on
    # v6e/v7x (packed EUP), f32 on v5e.
    e = jnp.exp((neg_d2 * KSCALE).astype(exp_dtype))              # (TQ, TK)

    # Single streamed MXU accumulation: numerator AND denominator (ones col).
    acc_ref[...] += jnp.dot(e.astype(jnp.bfloat16), h1_ref[0],
                            preferred_element_type=jnp.float32)   # (TQ, H_AUG)

    @pl.when(k_idx == pl.num_programs(2) - 1)
    def _():
        acc = acc_ref[...]
        num = acc[:, :HIDDEN]                                     # (TQ, H)
        den = acc[:, HIDDEN:HIDDEN + 1]                           # (TQ, 1)
        h2 = num * pl.reciprocal(den, approx=True)                # (TQ, H)
        h3 = jnp.maximum(
            jnp.dot(h2, w2_ref[...], preferred_element_type=jnp.float32)
            + b2_ref[...], 0.0)                                   # (TQ, H)
        out = jnp.dot(h3, w3_ref[...],
                      preferred_element_type=jnp.float32) + b3_ref[...]
        out_ref[0] = out.astype(out_ref.dtype)                    # lane-dense store


def point_feature_extractor(points, weights, params, *, tq=512, tk=1024,
                            bf16_exp=None):
    """points: (B, N, 3) f32, weights: (B, N, 1) f32 -> pointfea (B, N, 15) f32."""
    B, N, _ = points.shape
    w1, b1, w2, b2, w3, b3 = params

    tq = min(tq, N)
    tk = min(tk, N)
    assert N % tq == 0 and N % tk == 0, "N must be divisible by the tile sizes"

    if bf16_exp is None:
        bf16_exp = _supports_bf16_eup()
    exp_dtype = jnp.bfloat16 if bf16_exp else jnp.float32

    # ---- wrapper-side precompute (tiny vs. the O(N^2) kernel) ----------------
    # Augmented coordinates: one MXU matmul inside the kernel yields -d2.
    sq = jnp.sum(points * points, axis=-1, keepdims=True)            # (B, N, 1)
    ones = jnp.ones_like(sq)
    zpad = jnp.zeros((B, N, AUG_CH - 5), points.dtype)
    q_aug = jnp.concatenate([2.0 * points, -ones, -sq, zpad], axis=-1)   # (B, N, 8)
    k_aug = jnp.concatenate([points, sq, ones, zpad], axis=-1)           # (B, N, 8)
    k_aug_t = jnp.transpose(k_aug, (0, 2, 1))                            # (B, 8, N)

    # Layer-1 features precomputed once (weight_factor folded in), bf16, with a
    # ones column so the denominator rides the same MXU accumulation.
    h1 = jnp.maximum(weights * (w1 * WEIGHT_FACTOR)[None] + b1[None], 0.0)  # (B,N,H)
    h1_aug = jnp.concatenate(
        [h1, jnp.ones((B, N, 1), h1.dtype)], axis=-1).astype(jnp.bfloat16)  # (B,N,H+1)

    # Pad the output projection to a lane-dense 128-wide slab.
    w3p = jnp.zeros((HIDDEN, OUT_PAD), jnp.float32).at[:, :OUT_CH].set(w3)
    b3p = jnp.zeros((1, OUT_PAD), jnp.float32).at[:, :OUT_CH].set(b3)

    grid = (B, N // tq, N // tk)

    def full_spec(shape):
        return pl.BlockSpec(shape, lambda b, q, k: (0,) * len(shape))

    # VMEM budget: (TQ,TK) f32 temporaries + double-buffered tiles + accumulator.
    est_bytes = (3 * tq * tk * 4            # arg / e live temporaries (f32 worst case)
                 + 2 * tq * 128 * 4         # q_aug double buffer (lane-padded)
                 + 2 * 8 * tk * 4           # k_aug_t double buffer
                 + 2 * tk * 128 * 2         # h1_aug double buffer (lane-padded bf16)
                 + 2 * tq * OUT_PAD * 4     # output double buffer
                 + tq * 128 * 4)            # accumulator (lane-padded)
    # Clamp: >= 32 MiB (raises v5e's 16 MiB default), <= 48 MiB (safe on v7x's
    # 64 MiB physical VMEM per TensorCore).
    vmem_limit = int(min(48 * 2**20, max(32 * 2**20, 2 * est_bytes)))

    out = pl.pallas_call(
        functools.partial(_fea_kernel, exp_dtype=exp_dtype),
        out_shape=jax.ShapeDtypeStruct((B, N, OUT_PAD), jnp.float32),
        grid=grid,
        in_specs=[
            pl.BlockSpec((1, tq, AUG_CH), lambda b, q, k: (b, q, 0)),   # query aug
            pl.BlockSpec((1, AUG_CH, tk), lambda b, q, k: (b, 0, k)),   # key aug^T
            pl.BlockSpec((1, tk, H_AUG), lambda b, q, k: (b, k, 0)),    # layer-1 fea
            full_spec((HIDDEN, HIDDEN)),
            full_spec((1, HIDDEN)),
            full_spec((HIDDEN, OUT_PAD)),
            full_spec((1, OUT_PAD)),
        ],
        out_specs=pl.BlockSpec((1, tq, OUT_PAD), lambda b, q, k: (b, q, 0)),
        scratch_shapes=[
            pltpu.VMEM((tq, H_AUG), jnp.float32),   # numerator + denominator accum
        ],
        compiler_params=pltpu.CompilerParams(
            dimension_semantics=("parallel", "parallel", "arbitrary"),
            vmem_limit_bytes=vmem_limit),
    )(q_aug, k_aug_t, h1_aug, w2, b2, w3p, b3p)

    return out[..., :OUT_CH]


def init_params(key):
    """Deterministic synthetic parameters (stand-in for the pretrained model)."""
    k1, k2, k3 = jax.random.split(key, 3)
    w1 = jax.random.normal(k1, (IN_CH, HIDDEN), jnp.float32) * 0.5
    b1 = jnp.zeros((1, HIDDEN), jnp.float32)
    w2 = jax.random.normal(k2, (HIDDEN, HIDDEN), jnp.float32) * (1.0 / HIDDEN ** 0.5)
    b2 = jnp.zeros((1, HIDDEN), jnp.float32)
    w3 = jax.random.normal(k3, (HIDDEN, OUT_CH), jnp.float32) * (1.0 / HIDDEN ** 0.5)
    b3 = jnp.zeros((1, OUT_CH), jnp.float32)
    return (w1, b1, w2, b2, w3, b3)


def _reference(points, weights, params):
    """Pure-JAX dense reference used only for the correctness check."""
    w1, b1, w2, b2, w3, b3 = params
    fea0 = weights * WEIGHT_FACTOR                                    # (B, N, 1)
    h1 = jax.nn.relu(fea0 * w1[None] + b1[None])                      # (B, N, H)
    diff = points[:, :, None, :] - points[:, None, :, :]
    d2 = jnp.sum(diff * diff, axis=-1)                                # (B, N, N)
    k = jnp.exp(-d2 * KSCALE)
    k = k / jnp.sum(k, axis=-1, keepdims=True)
    h2 = jnp.einsum('bij,bjh->bih', k, h1)
    h3 = jax.nn.relu(jnp.einsum('bih,hk->bik', h2, w2) + b2[None])
    return jnp.einsum('bih,hk->bik', h3, w3) + b3[None]


class LungDeepFeatureExtractor:
    """Mirrors the PyTorch module's buffering / fixed semantics.

    `flowed` / `target` are dicts with 'points' (B,N,3) and 'weights' (B,N,1);
    the call returns copies with 'pointfea' (B,N,15) attached.
    """

    def __init__(self, params, fixed=False, tq=512, tk=1024):
        self.fixed = fixed
        self.params = params
        self.buffer = {}
        self._fn = jax.jit(functools.partial(self._extract_pair, tq=tq, tk=tk))

    def _extract_pair(self, f_pts, f_wts, t_pts, t_wts, *, tq, tk):
        pts = jnp.concatenate([f_pts, t_pts], axis=0)
        wts = jnp.concatenate([f_wts, t_wts], axis=0)
        fea = point_feature_extractor(pts, wts, self.params, tq=tq, tk=tk)
        B = f_pts.shape[0]
        return fea[:B], fea[B:]

    def __call__(self, flowed, target, iter=0):
        if (not self.fixed) or iter == 0:
            f_fea, t_fea = self._fn(flowed["points"], flowed["weights"],
                                    target["points"], target["weights"])
            # (torch.no_grad / .detach() is implicit: pure inference, no grads)
            self.buffer["flowed_pointfea"] = f_fea
            self.buffer["target_pointfea"] = t_fea
        else:  # fixed and iter > 0 -> reuse cached features
            f_fea = self.buffer["flowed_pointfea"]
            t_fea = self.buffer["target_pointfea"]
        flowed = dict(flowed, pointfea=f_fea)
        target = dict(target, pointfea=t_fea)
        return flowed, target


if __name__ == "__main__":
    # Small stand-in for initial_npoints=4096; tiles chosen so the streamed
    # key-reduction path (init / accumulate / finalize) is exercised.
    B, N = 2, 512
    TQ, TK = 128, 128
    key = jax.random.PRNGKey(0)
    kp, kq, kw1, kw2, kparams = jax.random.split(key, 5)

    flowed = {
        "points": jax.random.uniform(kp, (B, N, 3), jnp.float32),
        "weights": jax.random.uniform(kw1, (B, N, 1), jnp.float32) / N,
    }
    target = {
        "points": jax.random.uniform(kq, (B, N, 3), jnp.float32),
        "weights": jax.random.uniform(kw2, (B, N, 1), jnp.float32) / N,
    }

    params = init_params(kparams)
    extractor = LungDeepFeatureExtractor(params, fixed=True, tq=TQ, tk=TK)

    flowed_out, target_out = extractor(flowed, target, iter=0)
    jax.block_until_ready(flowed_out["pointfea"])
    jax.block_until_ready(target_out["pointfea"])

    # fixed=True, iter>0 -> must return cached buffer features unchanged
    flowed_out2, target_out2 = extractor(flowed, target, iter=1)
    assert flowed_out2["pointfea"] is extractor.buffer["flowed_pointfea"]

    assert flowed_out["pointfea"].shape == (B, N, OUT_CH)
    assert target_out["pointfea"].shape == (B, N, OUT_CH)
    assert flowed_out["pointfea"].dtype == jnp.float32
    assert bool(jnp.all(jnp.isfinite(flowed_out["pointfea"])))
    assert bool(jnp.all(jnp.isfinite(target_out["pointfea"])))

    # Numerical check of the streamed Pallas kernel against the dense reference
    # (tolerance allows for the bf16 MXU accumulation / bf16 exp path).
    ref_f = _reference(flowed["points"], flowed["weights"], params)
    ref_t = _reference(target["points"], target["weights"], params)
    scale = float(jnp.maximum(jnp.max(jnp.abs(ref_f)), jnp.max(jnp.abs(ref_t))))
    err_f = float(jnp.max(jnp.abs(flowed_out["pointfea"] - ref_f)))
    err_t = float(jnp.max(jnp.abs(target_out["pointfea"] - ref_t)))
    tol = 5e-2 + 5e-2 * scale
    assert err_f < tol and err_t < tol, (err_f, err_t, tol)

    print("KERNEL_OK")
</pallas_src>

<mosaic_0001>
module attributes {stable_mosaic.version = 11 : i64} {
  func.func @_fea_kernel(%arg0: i32, %arg1: i32, %arg2: i32, %arg3: memref<1x128x8xf32, #tpu.memory_space<vmem>>, %arg4: memref<1x8x128xf32, #tpu.memory_space<vmem>>, %arg5: memref<1x128x33xbf16, #tpu.memory_space<vmem>>, %arg6: memref<32x32xf32, #tpu.memory_space<vmem>>, %arg7: memref<1x32xf32, #tpu.memory_space<vmem>>, %arg8: memref<32x128xf32, #tpu.memory_space<vmem>>, %arg9: memref<1x128xf32, #tpu.memory_space<vmem>>, %arg10: memref<1x128x128xf32, #tpu.memory_space<vmem>>, %arg11: memref<128x33xf32, #tpu.memory_space<vmem>>) attributes {dimension_semantics = [#tpu.dimension_semantics<parallel>, #tpu.dimension_semantics<parallel>, #tpu.dimension_semantics<arbitrary>], iteration_bounds = array<i64: 4, 4, 4>, scalar_prefetch = 0 : i64, scratch_operands = 1 : i64, tpu.core_type = #tpu.core_type<tc>, window_params = [{transform_indices = @transform_0, window_bounds = array<i64: 1, 128, 8>}, {transform_indices = @transform_1, window_bounds = array<i64: 1, 8, 128>}, {transform_indices = @transform_2, window_bounds = array<i64: 1, 128, 33>}, {pipeline_mode = #tpu.pipeline_mode<synchronous>, transform_indices = @transform_3, window_bounds = array<i64: 32, 32>}, {pipeline_mode = #tpu.pipeline_mode<synchronous>, transform_indices = @transform_4, window_bounds = array<i64: 1, 32>}, {pipeline_mode = #tpu.pipeline_mode<synchronous>, transform_indices = @transform_5, window_bounds = array<i64: 32, 128>}, {pipeline_mode = #tpu.pipeline_mode<synchronous>, transform_indices = @transform_6, window_bounds = array<i64: 1, 128>}, {transform_indices = @transform_7, window_bounds = array<i64: 1, 128, 128>}]} {
    %c0_i32 = arith.constant 0 : i32
    %0 = arith.cmpi eq, %arg2, %c0_i32 : i32
    %1 = arith.extui %0 : i1 to i32
    %c0_i32_0 = arith.constant 0 : i32
    %2 = arith.cmpi ne, %1, %c0_i32_0 : i32
    scf.if %2 {
      %cst_16 = arith.constant 0.000000e+00 : f32
      %21 = vector.broadcast %cst_16 : f32 to vector<128x33xf32>
      %c0_17 = arith.constant 0 : index
      %c0_18 = arith.constant 0 : index
      %22 = vector.load %arg11[%c0_17, %c0_18] : memref<128x33xf32, #tpu.memory_space<vmem>>, vector<128x33xf32>
      tpu.vector_store %arg11[%c0_17, %c0_18], %21 {strides = array<i32>} : memref<128x33xf32, #tpu.memory_space<vmem>>, vector<128x33xf32>,
    } else {
    }
    %c0 = arith.constant 0 : index
    %c0_1 = arith.constant 0 : index
    %c0_2 = arith.constant 0 : index
    %3 = vector.load %arg3[%c0, %c0_1, %c0_2] : memref<1x128x8xf32, #tpu.memory_space<vmem>>, vector<1x128x8xf32>
    %4 = vector.shape_cast %3 : vector<1x128x8xf32> to vector<128x8xf32>
    %c0_3 = arith.constant 0 : index
    %c0_4 = arith.constant 0 : index
    %c0_5 = arith.constant 0 : index
    %5 = vector.load %arg4[%c0_3, %c0_4, %c0_5] : memref<1x8x128xf32, #tpu.memory_space<vmem>>, vector<1x8x128xf32>
    %6 = vector.shape_cast %5 : vector<1x8x128xf32> to vector<8x128xf32>
    %cst = arith.constant dense<0.000000e+00> : vector<128x128xf32>
    %7 = tpu.matmul %4, %6, %cst {dimension_numbers = #tpu.dot_dimension_numbers<[1], [0], [0], [1], [0, 0, 1, 1], [], []>} : vector<128x8xf32>, vector<8x128xf32>, vector<128x128xf32> -> vector<128x128xf32>
    %cst_6 = arith.constant 2.000000e+02 : f32
    %8 = vector.broadcast %cst_6 : f32 to vector<128x128xf32>
    %9 = arith.mulf %7, %8 : vector<128x128xf32>
    %10 = math.exp %9 : vector<128x128xf32>
    %c0_7 = arith.constant 0 : index
    %c0_8 = arith.constant 0 : index
    %11 = vector.load %arg11[%c0_7, %c0_8] : memref<128x33xf32, #tpu.memory_space<vmem>>, vector<128x33xf32>
    %12 = arith.truncf %10 : vector<128x128xf32> to vector<128x128xbf16>
    %c0_9 = arith.constant 0 : index
    %c0_10 = arith.constant 0 : index
    %c0_11 = arith.constant 0 : index
    %13 = vector.load %arg5[%c0_9, %c0_10, %c0_11] : memref<1x128x33xbf16, #tpu.memory_space<vmem>>, vector<1x128x33xbf16>
    %14 = vector.shape_cast %13 : vector<1x128x33xbf16> to vector<128x33xbf16>
    %cst_12 = arith.constant dense<0.000000e+00> : vector<128x33xf32>
    %15 = tpu.matmul %12, %14, %cst_12 {dimension_numbers = #tpu.dot_dimension_numbers<[1], [0], [0], [1], [0, 0, 1, 1], [], []>} : vector<128x128xbf16>, vector<128x33xbf16>, vector<128x33xf32> -> vector<128x33xf32>
    %16 = arith.addf %11, %15 : vector<128x33xf32>
    %c0_13 = arith.constant 0 : index
    %c0_14 = arith.constant 0 : index
    %17 = vector.load %arg11[%c0_13, %c0_14] : memref<128x33xf32, #tpu.memory_space<vmem>>, vector<128x33xf32>
    tpu.vector_store %arg11[%c0_13, %c0_14], %16 {strides = array<i32>} : memref<128x33xf32, #tpu.memory_space<vmem>>, vector<128x33xf32>,
    %c3_i32 = arith.constant 3 : i32
    %18 = arith.cmpi eq, %arg2, %c3_i32 : i32
    %19 = arith.extui %18 : i1 to i32
    %c0_i32_15 = arith.constant 0 : i32
    %20 = arith.cmpi ne, %19, %c0_i32_15 : i32
    scf.if %20 {
      %c0_16 = arith.constant 0 : index
      %c0_17 = arith.constant 0 : index
      %21 = vector.load %arg11[%c0_16, %c0_17] : memref<128x33xf32, #tpu.memory_space<vmem>>, vector<128x33xf32>
      %22 = vector.extract_strided_slice %21 {offsets = [0, 0], sizes = [128, 32], strides = [1, 1]} : vector<128x33xf32> to vector<128x32xf32>
      %23 = vector.extract_strided_slice %21 {offsets = [0, 32], sizes = [128, 1], strides = [1, 1]} : vector<128x33xf32> to vector<128x1xf32>
      %24 = tpu.reciprocal %23 {approx = true} : vector<128x1xf32> -> vector<128x1xf32>
      %25 = vector.broadcast %24 : vector<128x1xf32> to vector<128x32xf32>
      %26 = arith.mulf %22, %25 : vector<128x32xf32>
      %c0_18 = arith.constant 0 : index
      %c0_19 = arith.constant 0 : index
      %27 = vector.load %arg6[%c0_18, %c0_19] : memref<32x32xf32, #tpu.memory_space<vmem>>, vector<32x32xf32>
      %cst_20 = arith.constant dense<0.000000e+00> : vector<128x32xf32>
      %28 = tpu.matmul %26, %27, %cst_20 {dimension_numbers = #tpu.dot_dimension_numbers<[1], [0], [0], [1], [0, 0, 1, 1], [], []>} : vector<128x32xf32>, vector<32x32xf32>, vector<128x32xf32> -> vector<128x32xf32>
      %c0_21 = arith.constant 0 : index
      %c0_22 = arith.constant 0 : index
      %29 = vector.load %arg7[%c0_21, %c0_22] : memref<1x32xf32, #tpu.memory_space<vmem>>, vector<1x32xf32>
      %30 = vector.broadcast %29 : vector<1x32xf32> to vector<128x32xf32>
      %31 = arith.addf %28, %30 : vector<128x32xf32>
      %cst_23 = arith.constant 0.000000e+00 : f32
      %32 = vector.broadcast %cst_23 : f32 to vector<128x32xf32>
      %33 = arith.maximumf %31, %32 : vector<128x32xf32>
      %c0_24 = arith.constant 0 : index
      %c0_25 = arith.constant 0 : index
      %34 = vector.load %arg8[%c0_24, %c0_25] : memref<32x128xf32, #tpu.memory_space<vmem>>, vector<32x128xf32>
      %cst_26 = arith.constant dense<0.000000e+00> : vector<128x128xf32>
      %35 = tpu.matmul %33, %34, %cst_26 {dimension_numbers = #tpu.dot_dimension_numbers<[1], [0], [0], [1], [0, 0, 1, 1], [], []>} : vector<128x32xf32>, vector<32x128xf32>, vector<128x128xf32> -> vector<128x128xf32>
      %c0_27 = arith.constant 0 : index
      %c0_28 = arith.constant 0 : index
      %36 = vector.load %arg9[%c0_27, %c0_28] : memref<1x128xf32, #tpu.memory_space<vmem>>, vector<1x128xf32>
      %37 = vector.broadcast %36 : vector<1x128xf32> to vector<128x128xf32>
      %38 = arith.addf %35, %37 : vector<128x128xf32>
      %c0_29 = arith.constant 0 : index
      %c0_30 = arith.constant 0 : index
      %c0_31 = arith.constant 0 : index
      %39 = vector.load %arg10[%c0_29, %c0_30, %c0_31] : memref<1x128x128xf32, #tpu.memory_space<vmem>>, vector<1x128x128xf32>
      %40 = vector.shape_cast %39 : vector<1x128x128xf32> to vector<128x128xf32>
      %41 = vector.shape_cast %38 : vector<128x128xf32> to vector<1x128x128xf32>
      tpu.vector_store %arg10[%c0_29, %c0_30, %c0_31], %41 {strides = array<i32>} : memref<1x128x128xf32, #tpu.memory_space<vmem>>, vector<1x128x128xf32>,
    } else {
    }
    return
  }
  func.func @transform_0(%arg0: i32, %arg1: i32, %arg2: i32) -> (i32, i32, i32) {
    %c0_i32 = arith.constant 0 : i32
    %c0_i32_0 = arith.constant 0 : i32
    return %arg0, %arg1, %c0_i32 : i32, i32, i32
  }
  func.func @transform_1(%arg0: i32, %arg1: i32, %arg2: i32) -> (i32, i32, i32) {
    %c0_i32 = arith.constant 0 : i32
    %c0_i32_0 = arith.constant 0 : i32
    return %arg0, %c0_i32, %arg2 : i32, i32, i32
  }
  func.func @transform_2(%arg0: i32, %arg1: i32, %arg2: i32) -> (i32, i32, i32) {
    %c0_i32 = arith.constant 0 : i32
    %c0_i32_0 = arith.constant 0 : i32
    return %arg0, %arg2, %c0_i32 : i32, i32, i32
  }
  func.func @transform_3(%arg0: i32, %arg1: i32, %arg2: i32) -> (i32, i32) {
    %c0_i32 = arith.constant 0 : i32
    %c0_i32_0 = arith.constant 0 : i32
    %c0_i32_1 = arith.constant 0 : i32
    return %c0_i32, %c0_i32_0 : i32, i32
  }
  func.func @transform_4(%arg0: i32, %arg1: i32, %arg2: i32) -> (i32, i32) {
    %c0_i32 = arith.constant 0 : i32
    %c0_i32_0 = arith.constant 0 : i32
    %c0_i32_1 = arith.constant 0 : i32
    return %c0_i32, %c0_i32_0 : i32, i32
  }
  func.func @transform_5(%arg0: i32, %arg1: i32, %arg2: i32) -> (i32, i32) {
    %c0_i32 = arith.constant 0 : i32
    %c0_i32_0 = arith.constant 0 : i32
    %c0_i32_1 = arith.constant 0 : i32
    return %c0_i32, %c0_i32_0 : i32, i32
  }
  func.func @transform_6(%arg0: i32, %arg1: i32, %arg2: i32) -> (i32, i32) {
    %c0_i32 = arith.constant 0 : i32
    %c0_i32_0 = arith.constant 0 : i32
    %c0_i32_1 = arith.constant 0 : i32
    return %c0_i32, %c0_i32_0 : i32, i32
  }
  func.func @transform_7(%arg0: i32, %arg1: i32, %arg2: i32) -> (i32, i32, i32) {
    %c0_i32 = arith.constant 0 : i32
    %c0_i32_0 = arith.constant 0 : i32
    return %arg0, %arg1, %c0_i32 : i32, i32, i32
  }
}

</mosaic_0001>

<llo_original>
// kernel: _extract_pair.1
$region0: #{_extract_pair.1}
  #allocation0 [shape = 'u32[]', space=smem, size = 0x4, offset = 0x4, fixed_abs, tag = 'smem constant byte address 0x4 - core index']
  #allocation1 [shape = 'u32[144,128]{1,0:T(1,128)}', space=vmem, size = 0x12000, scoped, tag = 'internal scratch']
  #allocation2 [shape = 'f32[128,33]{1,0:T(8,128)}', space=vmem, size = 0x10000, scoped, tag = 'scratch operand']
  %s0 = inlined_call_operand.vmem [shape: f32[4,512,8], index: 0, kind: input, shape index: {}]
  %s1 = inlined_call_operand.vmem [shape: f32[4,8,512], index: 1, kind: input, shape index: {}]
  %s2 = inlined_call_operand.vmem [shape: bf16[4,512,33], index: 2, kind: input, shape index: {}]
  %s3 = inlined_call_operand.vmem [shape: f32[32,32], index: 3, kind: input, shape index: {}]
  %s4 = inlined_call_operand.vmem [shape: f32[1,32], index: 4, kind: input, shape index: {}]
  %s5 = inlined_call_operand.vmem [shape: f32[32,128], index: 5, kind: input, shape index: {}]
  %s6 = inlined_call_operand.vmem [shape: f32[1,128], index: 6, kind: input, shape index: {}]
  %s7 = inlined_call_operand.vmem [shape: f32[4,512,128], index: 7, kind: output, shape index: {}]
  %s8 = sld [smem:[#allocation0]]
  $region69: #{_extract_pair.1} parent=0
    _
  %s10 = ssub.s32 1, %s8
  %s11 = scalar_select 0, %s10, %s8
  loop: start=0, step=1, limit=66
  $region2: #{_extract_pair.1} parent=0 // loop_pre_header
    _
  $region3: #{_extract_pair.1} parent=0 // loop_header
    %s13 = sphi 0, %s17
    %p14 = scmp.ge.s32.totalorder %s13, 66
    %s20 = sphi 0, %s39
    %s21 = sphi 0, %s35
    %s22 = sphi 0, %s31
    %s23 = sphi 0, %s20
    %s24 = sphi 0, %s21
    %s25 = sphi 0, %s22
    %s26 = sphi 0, %s23
    %s27 = sphi 0, %s24
    %s28 = sphi 0, %s25
    %s44 = sphi 0, %s46
    %s47 = sphi 0, %s44
    %s48 = sphi 0, %s47
    %s64 = sphi 0, %s48
    %s72 = sphi 0, %s74
    %s75 = sphi 0, %s72
    %s76 = sphi 0, %s75
    %s92 = sphi 0, %s76
    %s100 = sphi 0, %s102
    %s103 = sphi 0, %s100
    %s104 = sphi 0, %s103
    %s120 = sphi 0, %s104
    %s124 = sphi 0, %s124
    %s126 = sphi 0, %s124
    %s127 = sphi 0, %s126
    %s141 = sphi 0, %s127
    %s145 = sphi 0, %s145
    %s147 = sphi 0, %s145
    %s148 = sphi 0, %s147
    %s162 = sphi 0, %s148
    %s166 = sphi 0, %s166
    %s168 = sphi 0, %s166
    %s169 = sphi 0, %s168
    %s183 = sphi 0, %s169
    %s187 = sphi 0, %s187
    %s189 = sphi 0, %s187
    %s190 = sphi 0, %s189
    %s204 = sphi 0, %s190
    %s212 = sphi 0, %s214
    %s215 = sphi 0, %s212
    %s216 = sphi 0, %s215
    %s232 = sphi 0, %s216
  $region4: #{_extract_pair.1} parent=0 // loop_header_branch
    %16 = sbr.rel (%p14) target = $region8
  $region5: #{_extract_pair.1} parent=0 // loop_body
    %s18 = ssub.s32 %s13, 1
    %s19 = ssub.s32 %s13, 2
    %s29 = sadd.s32 1, %s22
    %p30 = scmp.ge.s32.totalorder %s29, 4
    %s31 = scalar_select %p30, 0, %s29
    %s32 = sadd.s32 1, %s21
    %s33 = scalar_select %p30, %s32, %s21
    %p34 = scmp.ge.s32.totalorder %s33, 4
    %s35 = scalar_select %p34, 0, %s33
    %s36 = sadd.s32 1, %s20
    %s37 = scalar_select %p34, %s36, %s20
    %p38 = scmp.ge.s32.totalorder %s37, 4
    %s39 = scalar_select %p38, 0, %s37
    %s40 = ssub.s32 %s20, %s39
    %s41 = ssub.s32 %s21, %s35
    %s42 = sor.u32 %s40, %s41
    %p43 = scmp.eq.s32.totalorder %s42, 0
    %s45 = sadd.s32 %s44, 1
    %s46 = scalar_select %p43, %s44, %s45
    %p49 = pneg %p43
    %p50 = scmp.eq.s32.totalorder %s13, 63
    %p51 = por %p49, %p50
    %p52 = scmp.ne.s32.totalorder %s44, %s47
    %p53 = scmp.eq.s32.totalorder %s13, 0
    %p54 = por %p52, %p53
    %p55 = scmp.ne.s32.totalorder %s44, %s47
    %p56 = scmp.eq.s32.totalorder %s18, 63
    %p57 = por %p55, %p56
    %p58 = scmp.ne.s32.totalorder %s47, %s48
    %p59 = scmp.eq.s32.totalorder %s18, 0
    %p60 = por %p58, %p59
    %p61 = scmp.ne.s32.totalorder %s47, %s48
    %p62 = scmp.eq.s32.totalorder %s19, 63
    %p63 = por %p61, %p62
    %p65 = scmp.ne.s32.totalorder %s48, %s64
    %p66 = scmp.eq.s32.totalorder %s19, 0
    %p67 = por %p65, %p66
    %s68 = ssub.s32 %s20, %s39
    %s69 = ssub.s32 %s22, %s31
    %s70 = sor.u32 %s68, %s69
    %p71 = scmp.eq.s32.totalorder %s70, 0
    %s73 = sadd.s32 %s72, 1
    %s74 = scalar_select %p71, %s72, %s73
    %p77 = pneg %p71
    %p78 = scmp.eq.s32.totalorder %s13, 63
    %p79 = por %p77, %p78
    %p80 = scmp.ne.s32.totalorder %s72, %s75
    %p81 = scmp.eq.s32.totalorder %s13, 0
    %p82 = por %p80, %p81
    %p83 = scmp.ne.s32.totalorder %s72, %s75
    %p84 = scmp.eq.s32.totalorder %s18, 63
    %p85 = por %p83, %p84
    %p86 = scmp.ne.s32.totalorder %s75, %s76
    %p87 = scmp.eq.s32.totalorder %s18, 0
    %p88 = por %p86, %p87
    %p89 = scmp.ne.s32.totalorder %s75, %s76
    %p90 = scmp.eq.s32.totalorder %s19, 63
    %p91 = por %p89, %p90
    %p93 = scmp.ne.s32.totalorder %s76, %s92
    %p94 = scmp.eq.s32.totalorder %s19, 0
    %p95 = por %p93, %p94
    %s96 = ssub.s32 %s20, %s39
    %s97 = ssub.s32 %s22, %s31
    %s98 = sor.u32 %s96, %s97
    %p99 = scmp.eq.s32.totalorder %s98, 0
    %s101 = sadd.s32 %s100, 1
    %s102 = scalar_select %p99, %s100, %s101
    %p105 = pneg %p99
    %p106 = scmp.eq.s32.totalorder %s13, 63
    %p107 = por %p105, %p106
    %p108 = scmp.ne.s32.totalorder %s100, %s103
    %p109 = scmp.eq.s32.totalorder %s13, 0
    %p110 = por %p108, %p109
    %p111 = scmp.ne.s32.totalorder %s100, %s103
    %p112 = scmp.eq.s32.totalorder %s18, 63
    %p113 = por %p111, %p112
    %p114 = scmp.ne.s32.totalorder %s103, %s104
    %p115 = scmp.eq.s32.totalorder %s18, 0
    %p116 = por %p114, %p115
    %p117 = scmp.ne.s32.totalorder %s103, %s104
    %p118 = scmp.eq.s32.totalorder %s19, 63
    %p119 = por %p117, %p118
    %p121 = scmp.ne.s32.totalorder %s104, %s120
    %p122 = scmp.eq.s32.totalorder %s19, 0
    %p123 = por %p121, %p122
    %s125 = sadd.s32 %s124, 1
    %p128 = scmp.eq.s32.totalorder %s13, 63
    %p129 = scmp.ne.s32.totalorder %s124, %s126
    %p130 = scmp.eq.s32.totalorder %s13, 0
    %p131 = por %p129, %p130
    %p132 = scmp.ne.s32.totalorder %s124, %s126
    %p133 = scmp.eq.s32.totalorder %s18, 63
    %p134 = por %p132, %p133
    %p135 = scmp.ne.s32.totalorder %s126, %s127
    %p136 = scmp.eq.s32.totalorder %s18, 0
    %p137 = por %p135, %p136
    %p138 = scmp.ne.s32.totalorder %s126, %s127
    %p139 = scmp.eq.s32.totalorder %s19, 63
    %p140 = por %p138, %p139
    %p142 = scmp.ne.s32.totalorder %s127, %s141
    %p143 = scmp.eq.s32.totalorder %s19, 0
    %p144 = por %p142, %p143
    %s146 = sadd.s32 %s145, 1
    %p149 = scmp.eq.s32.totalorder %s13, 63
    %p150 = scmp.ne.s32.totalorder %s145, %s147
    %p151 = scmp.eq.s32.totalorder %s13, 0
    %p152 = por %p150, %p151
    %p153 = scmp.ne.s32.totalorder %s145, %s147
    %p154 = scmp.eq.s32.totalorder %s18, 63
    %p155 = por %p153, %p154
    %p156 = scmp.ne.s32.totalorder %s147, %s148
    %p157 = scmp.eq.s32.totalorder %s18, 0
    %p158 = por %p156, %p157
    %p159 = scmp.ne.s32.totalorder %s147, %s148
    %p160 = scmp.eq.s32.totalorder %s19, 63
    %p161 = por %p159, %p160
    %p163 = scmp.ne.s32.totalorder %s148, %s162
    %p164 = scmp.eq.s32.totalorder %s19, 0
    %p165 = por %p163, %p164
    %s167 = sadd.s32 %s166, 1
    %p170 = scmp.eq.s32.totalorder %s13, 63
    %p171 = scmp.ne.s32.totalorder %s166, %s168
    %p172 = scmp.eq.s32.totalorder %s13, 0
    %p173 = por %p171, %p172
    %p174 = scmp.ne.s32.totalorder %s166, %s168
    %p175 = scmp.eq.s32.totalorder %s18, 63
    %p176 = por %p174, %p175
    %p177 = scmp.ne.s32.totalorder %s168, %s169
    %p178 = scmp.eq.s32.totalorder %s18, 0
    %p179 = por %p177, %p178
    %p180 = scmp.ne.s32.totalorder %s168, %s169
    %p181 = scmp.eq.s32.totalorder %s19, 63
    %p182 = por %p180, %p181
    %p184 = scmp.ne.s32.totalorder %s169, %s183
    %p185 = scmp.eq.s32.totalorder %s19, 0
    %p186 = por %p184, %p185
    %s188 = sadd.s32 %s187, 1
    %p191 = scmp.eq.s32.totalorder %s13, 63
    %p192 = scmp.ne.s32.totalorder %s187, %s189
    %p193 = scmp.eq.s32.totalorder %s13, 0
    %p194 = por %p192, %p193
    %p195 = scmp.ne.s32.totalorder %s187, %s189
    %p196 = scmp.eq.s32.totalorder %s18, 63
    %p197 = por %p195, %p196
    %p198 = scmp.ne.s32.totalorder %s189, %s190
    %p199 = scmp.eq.s32.totalorder %s18, 0
    %p200 = por %p198, %p199
    %p201 = scmp.ne.s32.totalorder %s189, %s190
    %p202 = scmp.eq.s32.totalorder %s19, 63
    %p203 = por %p201, %p202
    %p205 = scmp.ne.s32.totalorder %s190, %s204
    %p206 = scmp.eq.s32.totalorder %s19, 0
    %p207 = por %p205, %p206
    %s208 = ssub.s32 %s20, %s39
    %s209 = ssub.s32 %s21, %s35
    %s210 = sor.u32 %s208, %s209
    %p211 = scmp.eq.s32.totalorder %s210, 0
    %s213 = sadd.s32 %s212, 1
    %s214 = scalar_select %p211, %s212, %s213
    %p217 = pneg %p211
    %p218 = scmp.eq.s32.totalorder %s13, 63
    %p219 = por %p217, %p218
    %p220 = scmp.ne.s32.totalorder %s212, %s215
    %p221 = scmp.eq.s32.totalorder %s13, 0
    %p222 = por %p220, %p221
    %p223 = scmp.ne.s32.totalorder %s212, %s215
    %p224 = scmp.eq.s32.totalorder %s18, 63
    %p225 = por %p223, %p224
    %p226 = scmp.ne.s32.totalorder %s215, %s216
    %p227 = scmp.eq.s32.totalorder %s18, 0
    %p228 = por %p226, %p227
    %p229 = scmp.ne.s32.totalorder %s215, %s216
    %p230 = scmp.eq.s32.totalorder %s19, 63
    %p231 = por %p229, %p230
    %p233 = scmp.ne.s32.totalorder %s216, %s232
    %p234 = scmp.eq.s32.totalorder %s19, 0
    %p235 = por %p233, %p234
    %p236 = scmp.le.s32.totalorder 1, %s13
    %p237 = scmp.lt.s32.totalorder %s13, 65
    %p238 = pnand %p236, %p237
    %p239 = pneg %p238
    // Predicated region
    $region9: #{_extract_pair.1} parent=5 // pred_check
      _
    $region10: #{_extract_pair.1} parent=5 // pred_check_branch
      %241 = sbr.rel (%p238) target = $region12
    $region11: #{_extract_pair.1} parent=5 // pred_region
      %s242 = ssub.s32 %s13, 1
      // Predicated region
      $region13: #{_extract_pair.1} parent=11 // pred_check
        %p243 = pneg %p137
      $region14: #{_extract_pair.1} parent=11 // pred_check_branch
        %245 = sbr.rel (%p243) target = $region16
      $region15: #{_extract_pair.1} parent=11 // pred_region
        _
      $region16: #{_extract_pair.1} parent=11 // pred_fallthru
        _
      // Predicated region
      $region17: #{_extract_pair.1} parent=11 // pred_check
        %p246 = pneg %p158
      $region18: #{_extract_pair.1} parent=11 // pred_check_branch
        %248 = sbr.rel (%p246) target = $region20
      $region19: #{_extract_pair.1} parent=11 // pred_region
        _
      $region20: #{_extract_pair.1} parent=11 // pred_fallthru
        _
      // Predicated region
      $region21: #{_extract_pair.1} parent=11 // pred_check
        %p249 = pneg %p179
      $region22: #{_extract_pair.1} parent=11 // pred_check_branch
        %251 = sbr.rel (%p249) target = $region24
      $region23: #{_extract_pair.1} parent=11 // pred_region
        _
      $region24: #{_extract_pair.1} parent=11 // pred_fallthru
        _
      // Predicated region
      $region25: #{_extract_pair.1} parent=11 // pred_check
        %p252 = pneg %p200
      $region26: #{_extract_pair.1} parent=11 // pred_check_branch
        %254 = sbr.rel (%p252) target = $region28
      $region27: #{_extract_pair.1} parent=11 // pred_region
        _
      $region28: #{_extract_pair.1} parent=11 // pred_fallthru
        _
    $region12: #{_extract_pair.1} parent=5 // pred_fallthru
      _
    %p255 = scmp.lt.s32.totalorder %s13, 64
    // Predicated region
    $region29: #{_extract_pair.1} parent=5 // pred_check
      %p256 = pneg %p255
    $region30: #{_extract_pair.1} parent=5 // pred_check_branch
      %258 = sbr.rel (%p256) target = $region32
    $region31: #{_extract_pair.1} parent=5 // pred_region
      // Predicated region
      $region33: #{_extract_pair.1} parent=31 // pred_check
        %p259 = pneg %p54
      $region34: #{_extract_pair.1} parent=31 // pred_check_branch
        %261 = sbr.rel (%p259) target = $region36
      $region35: #{_extract_pair.1} parent=31 // pred_region
        %s262 = smul.u32 16, %s21
        %p263 = scmp.lt.s32.totalorder %s20, 3
        %s264 = scalar_select %p263, %s20, 3
        %p265 = scmp.lt.s32.totalorder %s262, 63
        %s266 = scalar_select %p265, %s262, 63
        %s267 = smul.addr %s264, 64
        %s268 = sadd.s32 %s266, %s267
        %s269 = smul.addr %s268, 8
        %s270 = scalar_lea.vmem %s0, %s269
        %s271 = smul.u32 16, %s21
      $region36: #{_extract_pair.1} parent=31 // pred_fallthru
        _
      // Predicated region
      $region37: #{_extract_pair.1} parent=31 // pred_check
        %p272 = pneg %p82
      $region38: #{_extract_pair.1} parent=31 // pred_check_branch
        %274 = sbr.rel (%p272) target = $region40
      $region39: #{_extract_pair.1} parent=31 // pred_region
        %p275 = scmp.lt.s32.totalorder %s20, 3
        %s276 = scalar_select %p275, %s20, 3
        %p277 = scmp.lt.s32.totalorder %s22, 3
        %s278 = scalar_select %p277, %s22, 3
        %s279 = smul.addr %s276, 4
        %s280 = sadd.s32 %s278, %s279
        %s281 = smul.addr %s280, 8
        %s282 = scalar_lea.vmem %s1, %s281
      $region40: #{_extract_pair.1} parent=31 // pred_fallthru
        _
      // Predicated region
      $region41: #{_extract_pair.1} parent=31 // pred_check
        %p283 = pneg %p110
      $region42: #{_extract_pair.1} parent=31 // pred_check_branch
        %285 = sbr.rel (%p283) target = $region44
      $region43: #{_extract_pair.1} parent=31 // pred_region
        %s286 = smul.u32 16, %s22
        %p287 = scmp.lt.s32.totalorder %s20, 3
        %s288 = scalar_select %p287, %s20, 3
        %p289 = scmp.lt.s32.totalorder %s286, 63
        %s290 = scalar_select %p289, %s286, 63
        %s291 = smul.addr %s288, 64
        %s292 = sadd.s32 %s290, %s291
        %s293 = smul.addr %s292, 4
        %s294 = scalar_lea.vmem %s2, %s293
        %s295 = smul.u32 16, %s22
      $region44: #{_extract_pair.1} parent=31 // pred_fallthru
        _
    $region32: #{_extract_pair.1} parent=5 // pred_fallthru
      _
    %p296 = scmp.le.s32.totalorder 1, %s13
    %p297 = scmp.lt.s32.totalorder %s13, 65
    %p298 = pnand %p296, %p297
    %p299 = pneg %p298
    // Predicated region
    $region45: #{_extract_pair.1} parent=5 // pred_check
      _
    $region46: #{_extract_pair.1} parent=5 // pred_check_branch
      %301 = sbr.rel (%p298) target = $region48
    $region47: #{_extract_pair.1} parent=5 // pred_region
      %s302 = ssub.s32 %s13, 1
      %s303 = smul.u32 16, %s24
      %p304 = scmp.lt.s32.totalorder %s23, 3
      %s305 = scalar_select %p304, %s23, 3
      %p306 = scmp.lt.s32.totalorder %s303, 63
      %s307 = scalar_select %p306, %s303, 63
      %s308 = smul.addr %s305, 64
      %s309 = sadd.s32 %s307, %s308
      %s310 = smul.addr %s309, 8
      %s311 = scalar_lea.vmem %s0, %s310
      %p312 = pneg %p60
      %p313 = pneg %p57
      %p314 = scmp.lt.s32.totalorder %s23, 3
      %s315 = scalar_select %p314, %s23, 3
      %p316 = scmp.lt.s32.totalorder %s25, 3
      %s317 = scalar_select %p316, %s25, 3
      %s318 = smul.addr %s315, 4
      %s319 = sadd.s32 %s317, %s318
      %s320 = smul.addr %s319, 8
      %s321 = scalar_lea.vmem %s1, %s320
      %p322 = pneg %p88
      %p323 = pneg %p85
      %s324 = smul.u32 16, %s25
      %p325 = scmp.lt.s32.totalorder %s23, 3
      %s326 = scalar_select %p325, %s23, 3
      %p327 = scmp.lt.s32.totalorder %s324, 63
      %s328 = scalar_select %p327, %s324, 63
      %s329 = smul.addr %s326, 64
      %s330 = sadd.s32 %s328, %s329
      %s331 = smul.addr %s330, 4
      %s332 = scalar_lea.vmem %s2, %s331
      %p333 = pneg %p116
      %p334 = pneg %p113
      %p335 = pneg %p137
      %p336 = pneg %p134
      %p337 = pneg %p158
      %p338 = pneg %p155
      %p339 = pneg %p179
      %p340 = pneg %p176
      %p341 = pneg %p200
      %p342 = pneg %p197
      %p343 = pneg %p228
      %p344 = pneg %p225
      %s345 = smul.u32 16, %s24
      %p346 = scmp.lt.s32.totalorder %s23, 3
      %s347 = scalar_select %p346, %s23, 3
      %p348 = scmp.lt.s32.totalorder %s345, 63
      %s349 = scalar_select %p348, %s345, 63
      %s350 = smul.addr %s347, 64
      %s351 = sadd.s32 %s349, %s350
      %s352 = smul.addr %s351, 8
      %s353 = scalar_lea.vmem %s7, %s352
      %s354 = smul.u32 16, %s24
      %p355 = scmp.lt.s32.totalorder %s23, 3
      %s356 = scalar_select %p355, %s23, 3
      %p357 = scmp.lt.s32.totalorder %s354, 63
      %s358 = scalar_select %p357, %s354, 63
      %s359 = smul.addr %s356, 64
      %s360 = sadd.s32 %s358, %s359
      %s361 = smul.addr %s360, 8
      %s362 = scalar_lea.vmem %s0, %s361
      %s363 = smul.u32 16, %s24
      %p364 = scmp.lt.s32.totalorder %s23, 3
      %s365 = scalar_select %p364, %s23, 3
      %p366 = scmp.lt.s32.totalorder %s25, 3
      %s367 = scalar_select %p366, %s25, 3
      %s368 = smul.addr %s365, 4
      %s369 = sadd.s32 %s367, %s368
      %s370 = smul.addr %s369, 8
      %s371 = scalar_lea.vmem %s1, %s370
      %s372 = smul.u32 16, %s25
      %p373 = scmp.lt.s32.totalorder %s23, 3
      %s374 = scalar_select %p373, %s23, 3
      %p375 = scmp.lt.s32.totalorder %s372, 63
      %s376 = scalar_select %p375, %s372, 63
      %s377 = smul.addr %s374, 64
      %s378 = sadd.s32 %s376, %s377
      %s379 = smul.addr %s378, 4
      %s380 = scalar_lea.vmem %s2, %s379
      %s381 = smul.u32 16, %s25
      %s382 = smul.u32 16, %s24
      %p383 = scmp.lt.s32.totalorder %s23, 3
      %s384 = scalar_select %p383, %s23, 3
      %p385 = scmp.lt.s32.totalorder %s382, 63
      %s386 = scalar_select %p385, %s382, 63
      %s387 = smul.addr %s384, 64
      %s388 = sadd.s32 %s386, %s387
      %s389 = smul.addr %s388, 8
      %s390 = scalar_lea.vmem %s7, %s389
      %s391 = smul.u32 16, %s24
      %p393 = scmp.eq.s32.totalorder %s25, 0
      // Predicated region
      $region49: #{_extract_pair.1} parent=47 // pred_check
        %p394 = pneg %p393
      $region50: #{_extract_pair.1} parent=47 // pred_check_branch
        %396 = sbr.rel (%p394) target = $region52
      $region51: #{_extract_pair.1} parent=47 // pred_region
        %vm397 = vcmask 269312
        %398 = vst.msk [vmem:[#allocation2] sm:$0xff] %vm397, 0.0
        %399 = vst.msk [vmem:[#allocation2 + $0x8] sm:$0xff] %vm397, 0.0
        %400 = vst.msk [vmem:[#allocation2 + $0x10] sm:$0xff] %vm397, 0.0
        %401 = vst.msk [vmem:[#allocation2 + $0x18] sm:$0xff] %vm397, 0.0
        %402 = vst.msk [vmem:[#allocation2 + $0x20] sm:$0xff] %vm397, 0.0
        %403 = vst.msk [vmem:[#allocation2 + $0x28] sm:$0xff] %vm397, 0.0
        %404 = vst.msk [vmem:[#allocation2 + $0x30] sm:$0xff] %vm397, 0.0
        %405 = vst.msk [vmem:[#allocation2 + $0x38] sm:$0xff] %vm397, 0.0
        %406 = vst.msk [vmem:[#allocation2 + $0x40] sm:$0xff] %vm397, 0.0
        %407 = vst.msk [vmem:[#allocation2 + $0x48] sm:$0xff] %vm397, 0.0
        %408 = vst.msk [vmem:[#allocation2 + $0x50] sm:$0xff] %vm397, 0.0
        %409 = vst.msk [vmem:[#allocation2 + $0x58] sm:$0xff] %vm397, 0.0
        %410 = vst.msk [vmem:[#allocation2 + $0x60] sm:$0xff] %vm397, 0.0
        %411 = vst.msk [vmem:[#allocation2 + $0x68] sm:$0xff] %vm397, 0.0
        %412 = vst.msk [vmem:[#allocation2 + $0x70] sm:$0xff] %vm397, 0.0
        %413 = vst.msk [vmem:[#allocation2 + $0x78] sm:$0xff] %vm397, 0.0
      $region52: #{_extract_pair.1} parent=47 // pred_fallthru
        _
      %v414 = vld [vmem:[%s362] sm:$0xff]
      %v415 = vld [vmem:[%s362 + $0x8] sm:$0xff]
      %v416 = vld [vmem:[%s362 + $0x10] sm:$0xff]
      %v417 = vld [vmem:[%s362 + $0x18] sm:$0xff]
      %v418 = vld [vmem:[%s362 + $0x20] sm:$0xff]
      %v419 = vld [vmem:[%s362 + $0x28] sm:$0xff]
      %v420 = vld [vmem:[%s362 + $0x30] sm:$0xff]
      %v421 = vld [vmem:[%s362 + $0x38] sm:$0xff]
      %v422 = vld [vmem:[%s362 + $0x40] sm:$0xff]
      %v423 = vld [vmem:[%s362 + $0x48] sm:$0xff]
      %v424 = vld [vmem:[%s362 + $0x50] sm:$0xff]
      %v425 = vld [vmem:[%s362 + $0x58] sm:$0xff]
      %v426 = vld [vmem:[%s362 + $0x60] sm:$0xff]
      %v427 = vld [vmem:[%s362 + $0x68] sm:$0xff]
      %v428 = vld [vmem:[%s362 + $0x70] sm:$0xff]
      %v429 = vld [vmem:[%s362 + $0x78] sm:$0xff]
      %v430 = vld [vmem:[%s371] sm:$0xff]
      %vm431 = vcmask 64512
      %v433 = vsel %vm431, %v414, 0
      %v436 = vsel %vm431, %v415, 0
      %v439 = vsel %vm431, %v416, 0
      %v442 = vsel %vm431, %v417, 0
      %v445 = vsel %vm431, %v418, 0
      %v448 = vsel %vm431, %v419, 0
      %v451 = vsel %vm431, %v420, 0
      %v454 = vsel %vm431, %v421, 0
      %v457 = vsel %vm431, %v422, 0
      %v460 = vsel %vm431, %v423, 0
      %v463 = vsel %vm431, %v424, 0
      %v466 = vsel %vm431, %v425, 0
      %v469 = vsel %vm431, %v426, 0
      %v472 = vsel %vm431, %v427, 0
      %v475 = vsel %vm431, %v428, 0
      %v478 = vsel %vm431, %v429, 0
      %480 = vmatprep.subr.mxu0 0.0
      %481 = vmatpush1.msra.mxu0 %v430
      %482 = vmatprep.subr.mxu0 0.0
      %483 = vmatpush1.msra.mxu0 0.0
      %484 = vmatprep.subr.mxu0 0.0
      %485 = vmatpush1.msra.mxu0 0.0
      %486 = vmatprep.subr.mxu0 0.0
      %487 = vmatpush1.msra.mxu0 0.0
      %488 = vmatprep.subr.mxu0 0.0
      %489 = vmatpush1.msra.mxu0 0.0
      %490 = vmatprep.subr.mxu0 0.0
      %491 = vmatpush1.msra.mxu0 0.0
      %492 = vmatprep.subr.mxu0 0.0
      %493 = vmatpush1.msra.mxu0 0.0
      %494 = vmatprep.subr.mxu0 0.0
      %495 = vmatpush1.msra.mxu0 0.0
      %496 = vmatprep.subr.mxu0 0.0
      %497 = vmatpush1.msra.mxu0 0.0
      %498 = vmatprep.subr.mxu0 0.0
      %499 = vmatpush1.msra.mxu0 0.0
      %500 = vmatprep.subr.mxu0 0.0
      %501 = vmatpush1.msra.mxu0 0.0
      %502 = vmatprep.subr.mxu0 0.0
      %503 = vmatpush1.msra.mxu0 0.0
      %504 = vmatprep.subr.mxu0 0.0
      %505 = vmatpush1.msra.mxu0 0.0
      %506 = vmatprep.subr.mxu0 0.0
      %507 = vmatpush1.msra.mxu0 0.0
      %508 = vmatprep.subr.mxu0 0.0
      %509 = vmatpush1.msra.mxu0 0.0
      %510 = vmatprep.subr.mxu0 0.0
      %511 = vmatpush1.msra.mxu0 0.0
      %512 = vmatprep.subr.mxu0 0.0
      %513 = vmatpush1.msra.mxu0 0.0
      %514 = vmatprep.subr.mxu0 0.0
      %515 = vmatpush1.msra.mxu0 0.0
      %516 = vmatprep.subr.mxu0 0.0
      %517 = vmatpush1.msra.mxu0 0.0
      %518 = vmatprep.subr.mxu0 0.0
      %519 = vmatpush1.msra.mxu0 0.0
      %520 = vmatprep.subr.mxu0 0.0
      %521 = vmatpush1.msra.mxu0 0.0
      %522 = vmatprep.subr.mxu0 0.0
      %523 = vmatpush1.msra.mxu0 0.0
      %524 = vmatprep.subr.mxu0 0.0
      %525 = vmatpush1.msra.mxu0 0.0
      %526 = vmatprep.subr.mxu0 0.0
      %527 = vmatpush1.msra.mxu0 0.0
      %528 = vmatprep.subr.mxu0 0.0
      %529 = vmatpush1.msra.mxu0 0.0
      %530 = vmatprep.subr.mxu0 0.0
      %531 = vmatpush1.msra.mxu0 0.0
      %532 = vmatprep.subr.mxu0 0.0
      %533 = vmatpush1.msra.mxu0 0.0
      %534 = vmatprep.subr.mxu0 0.0
      %535 = vmatpush1.msra.mxu0 0.0
      %536 = vmatprep.subr.mxu0 0.0
      %537 = vmatpush1.msra.mxu0 0.0
      %538 = vmatprep.subr.mxu0 0.0
      %539 = vmatpush1.msra.mxu0 0.0
      %540 = vmatprep.subr.mxu0 0.0
      %541 = vmatpush1.msra.mxu0 0.0
      %542 = vmatprep.subr.mxu0 0.0
      %543 = vmatpush1.msra.mxu0 0.0
      %544 = vmatprep.mubr.f32.mxu0 0.0
      %545 = vmatmul.mubr.f32.gmra.mrb[0].mxu0 %v433
      %v546 = vpop.f32.mrb[0].mxu0
      %v547 = vadd.f32 0.0, %v546
      %v548 = vpop.f32.mrb[0].mxu0
      %549 = vmatprep.mubr.f32.mxu0 0.0
      %550 = vmatmul.mubr.f32.gmra.mrb[0].mxu0 %v436
      %v551 = vpop.f32.mrb[0].mxu0
      %v552 = vadd.f32 0.0, %v551
      %v553 = vpop.f32.mrb[0].mxu0
      %554 = vmatprep.mubr.f32.mxu0 0.0
      %555 = vmatmul.mubr.f32.gmra.mrb[0].mxu0 %v439
      %v556 = vpop.f32.mrb[0].mxu0
      %v557 = vadd.f32 0.0, %v556
      %v558 = vpop.f32.mrb[0].mxu0
      %559 = vmatprep.mubr.f32.mxu0 0.0
      %560 = vmatmul.mubr.f32.gmra.mrb[0].mxu0 %v442
      %v561 = vpop.f32.mrb[0].mxu0
      %v562 = vadd.f32 0.0, %v561
      %v563 = vpop.f32.mrb[0].mxu0
      %564 = vmatprep.mubr.f32.mxu0 0.0
      %565 = vmatmul.mubr.f32.gmra.mrb[0].mxu0 %v445
      %v566 = vpop.f32.mrb[0].mxu0
      %v567 = vadd.f32 0.0, %v566
      %v568 = vpop.f32.mrb[0].mxu0
      %569 = vmatprep.mubr.f32.mxu0 0.0
      %570 = vmatmul.mubr.f32.gmra.mrb[0].mxu0 %v448
      %v571 = vpop.f32.mrb[0].mxu0
      %v572 = vadd.f32 0.0, %v571
      %v573 = vpop.f32.mrb[0].mxu0
      %574 = vmatprep.mubr.f32.mxu0 0.0
      %575 = vmatmul.mubr.f32.gmra.mrb[0].mxu0 %v451
      %v576 = vpop.f32.mrb[0].mxu0
      %v577 = vadd.f32 0.0, %v576
      %v578 = vpop.f32.mrb[0].mxu0
      %579 = vmatprep.mubr.f32.mxu0 0.0
      %580 = vmatmul.mubr.f32.gmra.mrb[0].mxu0 %v454
      %v581 = vpop.f32.mrb[0].mxu0
      %v582 = vadd.f32 0.0, %v581
      %v583 = vpop.f32.mrb[0].mxu0
      %584 = vmatprep.mubr.f32.mxu0 0.0
      %585 = vmatmul.mubr.f32.gmra.mrb[0].mxu0 %v457
      %v586 = vpop.f32.mrb[0].mxu0
      %v587 = vadd.f32 0.0, %v586
      %v588 = vpop.f32.mrb[0].mxu0
      %589 = vmatprep.mubr.f32.mxu0 0.0
      %590 = vmatmul.mubr.f32.gmra.mrb[0].mxu0 %v460
      %v591 = vpop.f32.mrb[0].mxu0
      %v592 = vadd.f32 0.0, %v591
      %v593 = vpop.f32.mrb[0].mxu0
      %594 = vmatprep.mubr.f32.mxu0 0.0
      %595 = vmatmul.mubr.f32.gmra.mrb[0].mxu0 %v463
      %v596 = vpop.f32.mrb[0].mxu0
      %v597 = vadd.f32 0.0, %v596
      %v598 = vpop.f32.mrb[0].mxu0
      %599 = vmatprep.mubr.f32.mxu0 0.0
      %600 = vmatmul.mubr.f32.gmra.mrb[0].mxu0 %v466
      %v601 = vpop.f32.mrb[0].mxu0
      %v602 = vadd.f32 0.0, %v601
      %v603 = vpop.f32.mrb[0].mxu0
      %604 = vmatprep.mubr.f32.mxu0 0.0
      %605 = vmatmul.mubr.f32.gmra.mrb[0].mxu0 %v469
      %v606 = vpop.f32.mrb[0].mxu0
      %v607 = vadd.f32 0.0, %v606
      %v608 = vpop.f32.mrb[0].mxu0
      %609 = vmatprep.mubr.f32.mxu0 0.0
      %610 = vmatmul.mubr.f32.gmra.mrb[0].mxu0 %v472
      %v611 = vpop.f32.mrb[0].mxu0
      %v612 = vadd.f32 0.0, %v611
      %v613 = vpop.f32.mrb[0].mxu0
      %614 = vmatprep.mubr.f32.mxu0 0.0
      %615 = vmatmul.mubr.f32.gmra.mrb[0].mxu0 %v475
      %v616 = vpop.f32.mrb[0].mxu0
      %v617 = vadd.f32 0.0, %v616
      %v618 = vpop.f32.mrb[0].mxu0
      %619 = vmatprep.mubr.f32.mxu0 0.0
      %620 = vmatmul.mubr.f32.gmra.mrb[0].mxu0 %v478
      %v621 = vpop.f32.mrb[0].mxu0
      %v622 = vadd.f32 0.0, %v621
      %v623 = vpop.f32.mrb[0].mxu0
      %624 = vdwg.mxu0
      %v625 = vmul.f32 %v547, 200.0
      %v626 = vmul.f32 %v552, 200.0
      %v627 = vmul.f32 %v557, 200.0
      %v628 = vmul.f32 %v562, 200.0
      %v629 = vmul.f32 %v567, 200.0
      %v630 = vmul.f32 %v572, 200.0
      %v631 = vmul.f32 %v577, 200.0
      %v632 = vmul.f32 %v582, 200.0
      %v633 = vmul.f32 %v587, 200.0
      %v634 = vmul.f32 %v592, 200.0
      %v635 = vmul.f32 %v597, 200.0
      %v636 = vmul.f32 %v602, 200.0
      %v637 = vmul.f32 %v607, 200.0
      %v638 = vmul.f32 %v612, 200.0
      %v639 = vmul.f32 %v617, 200.0
      %v640 = vmul.f32 %v622, 200.0
      %v641 = vmul.f32 %v625, 1.442695
      %v642 = vpow.pop %v641
      %v643 = vmul.f32 %v626, 1.442695
      %v644 = vpow.pop %v643
      %v645 = vmul.f32 %v627, 1.442695
      %v646 = vpow.pop %v645
      %v647 = vmul.f32 %v628, 1.442695
      %v648 = vpow.pop %v647
      %v649 = vmul.f32 %v629, 1.442695
      %v650 = vpow.pop %v649
      %v651 = vmul.f32 %v630, 1.442695
      %v652 = vpow.pop %v651
      %v653 = vmul.f32 %v631, 1.442695
      %v654 = vpow.pop %v653
      %v655 = vmul.f32 %v632, 1.442695
      %v656 = vpow.pop %v655
      %v657 = vmul.f32 %v633, 1.442695
      %v658 = vpow.pop %v657
      %v659 = vmul.f32 %v634, 1.442695
      %v660 = vpow.pop %v659
      %v661 = vmul.f32 %v635, 1.442695
      %v662 = vpow.pop %v661
      %v663 = vmul.f32 %v636, 1.442695
      %v664 = vpow.pop %v663
      %v665 = vmul.f32 %v637, 1.442695
      %v666 = vpow.pop %v665
      %v667 = vmul.f32 %v638, 1.442695
      %v668 = vpow.pop %v667
      %v669 = vmul.f32 %v639, 1.442695
      %v670 = vpow.pop %v669
      %v671 = vmul.f32 %v640, 1.442695
      %v672 = vpow.pop %v671
      %v673 = vld [vmem:[#allocation2] sm:$0xff]
      %v674 = vld [vmem:[#allocation2 + $0x8] sm:$0xff]
      %v675 = vld [vmem:[#allocation2 + $0x10] sm:$0xff]
      %v676 = vld [vmem:[#allocation2 + $0x18] sm:$0xff]
      %v677 = vld [vmem:[#allocation2 + $0x20] sm:$0xff]
      %v678 = vld [vmem:[#allocation2 + $0x28] sm:$0xff]
      %v679 = vld [vmem:[#allocation2 + $0x30] sm:$0xff]
      %v680 = vld [vmem:[#allocation2 + $0x38] sm:$0xff]
      %v681 = vld [vmem:[#allocation2 + $0x40] sm:$0xff]
      %v682 = vld [vmem:[#allocation2 + $0x48] sm:$0xff]
      %v683 = vld [vmem:[#allocation2 + $0x50] sm:$0xff]
      %v684 = vld [vmem:[#allocation2 + $0x58] sm:$0xff]
      %v685 = vld [vmem:[#allocation2 + $0x60] sm:$0xff]
      %v686 = vld [vmem:[#allocation2 + $0x68] sm:$0xff]
      %v687 = vld [vmem:[#allocation2 + $0x70] sm:$0xff]
      %v688 = vld [vmem:[#allocation2 + $0x78] sm:$0xff]
      %v689 = vpack.c.bf16 %v644, %v642
      %v690 = vpack.c.bf16 %v648, %v646
      %v691 = vpack.c.bf16 %v652, %v650
      %v692 = vpack.c.bf16 %v656, %v654
      %v693 = vpack.c.bf16 %v660, %v658
      %v694 = vpack.c.bf16 %v664, %v662
      %v695 = vpack.c.bf16 %v668, %v666
      %v696 = vpack.c.bf16 %v672, %v670
      %v697 = vld [vmem:[%s380] sm:$0xf]
      %v698 = vld [vmem:[%s380 + $0x4] sm:$0xf]
      %v699 = vld [vmem:[%s380 + $0x8] sm:$0xf]
      %v700 = vld [vmem:[%s380 + $0xc] sm:$0xf]
      %v701 = vld [vmem:[%s380 + $0x10] sm:$0xf]
      %v702 = vld [vmem:[%s380 + $0x14] sm:$0xf]
      %v703 = vld [vmem:[%s380 + $0x18] sm:$0xf]
      %v704 = vld [vmem:[%s380 + $0x1c] sm:$0xf]
      %v705 = vld [vmem:[%s380 + $0x20] sm:$0xf]
      %v706 = vld [vmem:[%s380 + $0x24] sm:$0xf]
      %v707 = vld [vmem:[%s380 + $0x28] sm:$0xf]
      %v708 = vld [vmem:[%s380 + $0x2c] sm:$0xf]
      %v709 = vld [vmem:[%s380 + $0x30] sm:$0xf]
      %v710 = vld [vmem:[%s380 + $0x34] sm:$0xf]
      %v711 = vld [vmem:[%s380 + $0x38] sm:$0xf]
      %v712 = vld [vmem:[%s380 + $0x3c] sm:$0xf]
      %v729 = vunpack.c.l.b16 %v697
      %v730 = vunpack.c.l.b16 %v698
      %v731 = vunpack.c.l.b16 %v699
      %v732 = vunpack.c.l.b16 %v700
      %v733 = vunpack.c.l.b16 %v701
      %v734 = vunpack.c.l.b16 %v702
      %v735 = vunpack.c.l.b16 %v703
      %v736 = vunpack.c.l.b16 %v704
      %v737 = vunpack.c.l.b16 %v705
      %v738 = vunpack.c.l.b16 %v706
      %v739 = vunpack.c.l.b16 %v707
      %v740 = vunpack.c.l.b16 %v708
      %v741 = vunpack.c.l.b16 %v709
      %v742 = vunpack.c.l.b16 %v710
      %v743 = vunpack.c.l.b16 %v711
      %v744 = vunpack.c.l.b16 %v712
      %v745 = vpack.c.b16 %v730, %v729
      %v746 = vpack.c.b16 %v732, %v731
      %v747 = vpack.c.b16 %v734, %v733
      %v748 = vpack.c.b16 %v736, %v735
      %v749 = vpack.c.b16 %v738, %v737
      %v750 = vpack.c.b16 %v740, %v739
      %v751 = vpack.c.b16 %v742, %v741
      %v752 = vpack.c.b16 %v744, %v743
      %761 = vmatprep.subr.bf16.mxu0 0
      %762 = vmatpush1.bf16.msra.mxu0 %v745
      %763 = vmatprep.subr.bf16.mxu0 0
      %764 = vmatpush1.bf16.msra.mxu0 %v746
      %765 = vmatprep.subr.bf16.mxu0 0
      %766 = vmatpush1.bf16.msra.mxu0 %v747
      %767 = vmatprep.subr.bf16.mxu0 0
      %768 = vmatpush1.bf16.msra.mxu0 %v748
      %769 = vmatprep.subr.bf16.mxu0 0
      %770 = vmatpush1.bf16.msra.mxu0 %v749
      %771 = vmatprep.subr.bf16.mxu0 0
      %772 = vmatpush1.bf16.msra.mxu0 %v750
      %773 = vmatprep.subr.bf16.mxu0 0
      %774 = vmatpush1.bf16.msra.mxu0 %v751
      %775 = vmatprep.subr.bf16.mxu0 0
      %776 = vmatpush1.bf16.msra.mxu0 %v752
      %777 = vmatprep.subr.bf16.mxu0 0
      %778 = vmatpush1.bf16.msra.mxu0 0
      %779 = vmatprep.subr.bf16.mxu0 0
      %780 = vmatpush1.bf16.msra.mxu0 0
      %781 = vmatprep.subr.bf16.mxu0 0
      %782 = vmatpush1.bf16.msra.mxu0 0
      %783 = vmatprep.subr.bf16.mxu0 0
      %784 = vmatpush1.bf16.msra.mxu0 0
      %785 = vmatprep.subr.bf16.mxu0 0
      %786 = vmatpush1.bf16.msra.mxu0 0
      %787 = vmatprep.subr.bf16.mxu0 0
      %788 = vmatpush1.bf16.msra.mxu0 0
      %789 = vmatprep.subr.bf16.mxu0 0
      %790 = vmatpush1.bf16.msra.mxu0 0
      %791 = vmatprep.subr.bf16.mxu0 0
      %792 = vmatpush1.bf16.msra.mxu0 0
      %793 = vmatprep.mubr.bf16.mxu0 0
      %794 = vmatmul.mubr.bf16.gmra.mrb[0].mxu0 %v689
      %v795 = vpop.f32.mrb[0].mxu0
      %v796 = vadd.f32 0.0, %v795
      %v797 = vpop.f32.mrb[0].mxu0
      %v798 = vpop.f32.mrb[0].mxu0
      %v799 = vadd.f32 0.0, %v798
      %v800 = vpop.f32.mrb[0].mxu0
      %801 = vmatprep.mubr.bf16.mxu0 0
      %802 = vmatmul.mubr.bf16.gmra.mrb[0].mxu0 %v690
      %v803 = vpop.f32.mrb[0].mxu0
      %v804 = vadd.f32 0.0, %v803
      %v805 = vpop.f32.mrb[0].mxu0
      %v806 = vpop.f32.mrb[0].mxu0
      %v807 = vadd.f32 0.0, %v806
      %v808 = vpop.f32.mrb[0].mxu0
      %809 = vmatprep.mubr.bf16.mxu0 0
      %810 = vmatmul.mubr.bf16.gmra.mrb[0].mxu0 %v691
      %v811 = vpop.f32.mrb[0].mxu0
      %v812 = vadd.f32 0.0, %v811
      %v813 = vpop.f32.mrb[0].mxu0
      %v814 = vpop.f32.mrb[0].mxu0
      %v815 = vadd.f32 0.0, %v814
      %v816 = vpop.f32.mrb[0].mxu0
      %817 = vmatprep.mubr.bf16.mxu0 0
      %818 = vmatmul.mubr.bf16.gmra.mrb[0].mxu0 %v692
      %v819 = vpop.f32.mrb[0].mxu0
      %v820 = vadd.f32 0.0, %v819
      %v821 = vpop.f32.mrb[0].mxu0
      %v822 = vpop.f32.mrb[0].mxu0
      %v823 = vadd.f32 0.0, %v822
      %v824 = vpop.f32.mrb[0].mxu0
      %825 = vmatprep.mubr.bf16.mxu0 0
      %826 = vmatmul.mubr.bf16.gmra.mrb[0].mxu0 %v693
      %v827 = vpop.f32.mrb[0].mxu0
      %v828 = vadd.f32 0.0, %v827
      %v829 = vpop.f32.mrb[0].mxu0
      %v830 = vpop.f32.mrb[0].mxu0
      %v831 = vadd.f32 0.0, %v830
      %v832 = vpop.f32.mrb[0].mxu0
      %833 = vmatprep.mubr.bf16.mxu0 0
      %834 = vmatmul.mubr.bf16.gmra.mrb[0].mxu0 %v694
      %v835 = vpop.f32.mrb[0].mxu0
      %v836 = vadd.f32 0.0, %v835
      %v837 = vpop.f32.mrb[0].mxu0
      %v838 = vpop.f32.mrb[0].mxu0
      %v839 = vadd.f32 0.0, %v838
      %v840 = vpop.f32.mrb[0].mxu0
      %841 = vmatprep.mubr.bf16.mxu0 0
      %842 = vmatmul.mubr.bf16.gmra.mrb[0].mxu0 %v695
      %v843 = vpop.f32.mrb[0].mxu0
      %v844 = vadd.f32 0.0, %v843
      %v845 = vpop.f32.mrb[0].mxu0
      %v846 = vpop.f32.mrb[0].mxu0
      %v847 = vadd.f32 0.0, %v846
      %v848 = vpop.f32.mrb[0].mxu0
      %849 = vmatprep.mubr.bf16.mxu0 0
      %850 = vmatmul.mubr.bf16.gmra.mrb[0].mxu0 %v696
      %v851 = vpop.f32.mrb[0].mxu0
      %v852 = vadd.f32 0.0, %v851
      %v853 = vpop.f32.mrb[0].mxu0
      %v854 = vpop.f32.mrb[0].mxu0
      %v855 = vadd.f32 0.0, %v854
      %v856 = vpop.f32.mrb[0].mxu0
      %857 = vdwg.mxu0
      %v858 = vadd.f32 %v673, %v796
      %v859 = vadd.f32 %v674, %v799
      %v860 = vadd.f32 %v675, %v804
      %v861 = vadd.f32 %v676, %v807
      %v862 = vadd.f32 %v677, %v812
      %v863 = vadd.f32 %v678, %v815
      %v864 = vadd.f32 %v679, %v820
      %v865 = vadd.f32 %v680, %v823
      %v866 = vadd.f32 %v681, %v828
      %v867 = vadd.f32 %v682, %v831
      %v868 = vadd.f32 %v683, %v836
      %v869 = vadd.f32 %v684, %v839
      %v870 = vadd.f32 %v685, %v844
      %v871 = vadd.f32 %v686, %v847
      %v872 = vadd.f32 %v687, %v852
      %v873 = vadd.f32 %v688, %v855
      %vm874 = vcmask 269312
      %875 = vst.msk [vmem:[#allocation2] sm:$0xff] %vm874, %v858
      %876 = vst.msk [vmem:[#allocation2 + $0x8] sm:$0xff] %vm874, %v859
      %877 = vst.msk [vmem:[#allocation2 + $0x10] sm:$0xff] %vm874, %v860
      %878 = vst.msk [vmem:[#allocation2 + $0x18] sm:$0xff] %vm874, %v861
      %879 = vst.msk [vmem:[#allocation2 + $0x20] sm:$0xff] %vm874, %v862
      %880 = vst.msk [vmem:[#allocation2 + $0x28] sm:$0xff] %vm874, %v863
      %881 = vst.msk [vmem:[#allocation2 + $0x30] sm:$0xff] %vm874, %v864
      %882 = vst.msk [vmem:[#allocation2 + $0x38] sm:$0xff] %vm874, %v865
      %883 = vst.msk [vmem:[#allocation2 + $0x40] sm:$0xff] %vm874, %v866
      %884 = vst.msk [vmem:[#allocation2 + $0x48] sm:$0xff] %vm874, %v867
      %885 = vst.msk [vmem:[#allocation2 + $0x50] sm:$0xff] %vm874, %v868
      %886 = vst.msk [vmem:[#allocation2 + $0x58] sm:$0xff] %vm874, %v869
      %887 = vst.msk [vmem:[#allocation2 + $0x60] sm:$0xff] %vm874, %v870
      %888 = vst.msk [vmem:[#allocation2 + $0x68] sm:$0xff] %vm874, %v871
      %889 = vst.msk [vmem:[#allocation2 + $0x70] sm:$0xff] %vm874, %v872
      %890 = vst.msk [vmem:[#allocation2 + $0x78] sm:$0xff] %vm874, %v873
      %p891 = scmp.eq.s32.totalorder %s25, 3
      // Predicated region
      $region53: #{_extract_pair.1} parent=47 // pred_check
        %p892 = pneg %p891
      $region54: #{_extract_pair.1} parent=47 // pred_check_branch
        %894 = sbr.rel (%p892) target = $region56
      $region55: #{_extract_pair.1} parent=47 // pred_region
        %v895 = vld [vmem:[#allocation2] sm:$0xff]
        %v896 = vld [vmem:[#allocation2 + $0x8] sm:$0xff]
        %v897 = vld [vmem:[#allocation2 + $0x10] sm:$0xff]
        %v898 = vld [vmem:[#allocation2 + $0x18] sm:$0xff]
        %v899 = vld [vmem:[#allocation2 + $0x20] sm:$0xff]
        %v900 = vld [vmem:[#allocation2 + $0x28] sm:$0xff]
        %v901 = vld [vmem:[#allocation2 + $0x30] sm:$0xff]
        %v902 = vld [vmem:[#allocation2 + $0x38] sm:$0xff]
        %v903 = vld [vmem:[#allocation2 + $0x40] sm:$0xff]
        %v904 = vld [vmem:[#allocation2 + $0x48] sm:$0xff]
        %v905 = vld [vmem:[#allocation2 + $0x50] sm:$0xff]
        %v906 = vld [vmem:[#allocation2 + $0x58] sm:$0xff]
        %v907 = vld [vmem:[#allocation2 + $0x60] sm:$0xff]
        %v908 = vld [vmem:[#allocation2 + $0x68] sm:$0xff]
        %v909 = vld [vmem:[#allocation2 + $0x70] sm:$0xff]
        %v910 = vld [vmem:[#allocation2 + $0x78] sm:$0xff]
        %v911 = vrcp.pop %v895
        %v912 = vrcp.pop %v896
        %v913 = vrcp.pop %v897
        %v914 = vrcp.pop %v898
        %v915 = vrcp.pop %v899
        %v916 = vrcp.pop %v900
        %v917 = vrcp.pop %v901
        %v918 = vrcp.pop %v902
        %v919 = vrcp.pop %v903
        %v920 = vrcp.pop %v904
        %v921 = vrcp.pop %v905
        %v922 = vrcp.pop %v906
        %v923 = vrcp.pop %v907
        %v924 = vrcp.pop %v908
        %v925 = vrcp.pop %v909
        %v926 = vrcp.pop %v910
        %928 = vset.pattern.permute.xlu0 32
        %929 = vperm.xlu0 %928, %v911
        %v930 = vpop.permute.xlu0 %929
        %933 = vset.pattern.permute.xlu0 32
        %934 = vperm.xlu0 %933, %v912
        %v935 = vpop.permute.xlu0 %934
        %938 = vset.pattern.permute.xlu0 32
        %939 = vperm.xlu0 %938, %v913
        %v940 = vpop.permute.xlu0 %939
        %943 = vset.pattern.permute.xlu0 32
        %944 = vperm.xlu0 %943, %v914
        %v945 = vpop.permute.xlu0 %944
        %948 = vset.pattern.permute.xlu0 32
        %949 = vperm.xlu0 %948, %v915
        %v950 = vpop.permute.xlu0 %949
        %953 = vset.pattern.permute.xlu0 32
        %954 = vperm.xlu0 %953, %v916
        %v955 = vpop.permute.xlu0 %954
        %958 = vset.pattern.permute.xlu0 32
        %959 = vperm.xlu0 %958, %v917
        %v960 = vpop.permute.xlu0 %959
        %963 = vset.pattern.permute.xlu0 32
        %964 = vperm.xlu0 %963, %v918
        %v965 = vpop.permute.xlu0 %964
        %968 = vset.pattern.permute.xlu0 32
        %969 = vperm.xlu0 %968, %v919
        %v970 = vpop.permute.xlu0 %969
        %973 = vset.pattern.permute.xlu0 32
        %974 = vperm.xlu0 %973, %v920
        %v975 = vpop.permute.xlu0 %974
        %978 = vset.pattern.permute.xlu0 32
        %979 = vperm.xlu0 %978, %v921
        %v980 = vpop.permute.xlu0 %979
        %983 = vset.pattern.permute.xlu0 32
        %984 = vperm.xlu0 %983, %v922
        %v985 = vpop.permute.xlu0 %984
        %988 = vset.pattern.permute.xlu0 32
        %989 = vperm.xlu0 %988, %v923
        %v990 = vpop.permute.xlu0 %989
        %993 = vset.pattern.permute.xlu0 32
        %994 = vperm.xlu0 %993, %v924
        %v995 = vpop.permute.xlu0 %994
        %998 = vset.pattern.permute.xlu0 32
        %999 = vperm.xlu0 %998, %v925
        %v1000 = vpop.permute.xlu0 %999
        %1003 = vset.pattern.permute.xlu0 32
        %1004 = vperm.xlu0 %1003, %v926
        %v1005 = vpop.permute.xlu0 %1004
        %v1007 = vmul.f32 %v895, %v930
        %v1008 = vmul.f32 %v896, %v935
        %v1009 = vmul.f32 %v897, %v940
        %v1010 = vmul.f32 %v898, %v945
        %v1011 = vmul.f32 %v899, %v950
        %v1012 = vmul.f32 %v900, %v955
        %v1013 = vmul.f32 %v901, %v960
        %v1014 = vmul.f32 %v902, %v965
        %v1015 = vmul.f32 %v903, %v970
        %v1016 = vmul.f32 %v904, %v975
        %v1017 = vmul.f32 %v905, %v980
        %v1018 = vmul.f32 %v906, %v985
        %v1019 = vmul.f32 %v907, %v990
        %v1020 = vmul.f32 %v908, %v995
        %v1021 = vmul.f32 %v909, %v1000
        %v1022 = vmul.f32 %v910, %v1005
        %v1023 = vld [vmem:[%s3] sm:$0xff]
        %v1024 = vld [vmem:[%s3 + $0x8] sm:$0xff]
        %v1025 = vld [vmem:[%s3 + $0x10] sm:$0xff]
        %v1026 = vld [vmem:[%s3 + $0x18] sm:$0xff]
        %v1027 = vld [vmem:[%s4] sm:$0x1]
        %v1029 = vlaneseq
        %v1030 = vshrl.u32 %v1029, 7
        %v1031 = vsub.s32 0, %v1030
        %v1032 = vrot.slane %v1027, %v1031
        %vm1034 = vcmask 261120
        %v1036 = vsel %vm1034, %v1007, 0
        %v1039 = vsel %vm1034, %v1008, 0
        %v1042 = vsel %vm1034, %v1009, 0
        %v1045 = vsel %vm1034, %v1010, 0
        %v1048 = vsel %vm1034, %v1011, 0
        %v1051 = vsel %vm1034, %v1012, 0
        %v1054 = vsel %vm1034, %v1013, 0
        %v1057 = vsel %vm1034, %v1014, 0
        %v1060 = vsel %vm1034, %v1015, 0
        %v1063 = vsel %vm1034, %v1016, 0
        %v1066 = vsel %vm1034, %v1017, 0
        %v1069 = vsel %vm1034, %v1018, 0
        %v1072 = vsel %vm1034, %v1019, 0
        %v1075 = vsel %vm1034, %v1020, 0
        %v1078 = vsel %vm1034, %v1021, 0
        %v1081 = vsel %vm1034, %v1022, 0
        %1083 = vmatprep.subr.mxu0 0.0
        %1084 = vmatpush1.msra.mxu0 %v1023
        %1085 = vmatprep.subr.mxu0 0.0
        %1086 = vmatpush1.msra.mxu0 %v1024
        %1087 = vmatprep.subr.mxu0 0.0
        %1088 = vmatpush1.msra.mxu0 %v1025
        %1089 = vmatprep.subr.mxu0 0.0
        %1090 = vmatpush1.msra.mxu0 %v1026
        %1091 = vmatprep.subr.mxu0 0.0
        %1092 = vmatpush1.msra.mxu0 0.0
        %1093 = vmatprep.subr.mxu0 0.0
        %1094 = vmatpush1.msra.mxu0 0.0
        %1095 = vmatprep.subr.mxu0 0.0
        %1096 = vmatpush1.msra.mxu0 0.0
        %1097 = vmatprep.subr.mxu0 0.0
        %1098 = vmatpush1.msra.mxu0 0.0
        %1099 = vmatprep.subr.mxu0 0.0
        %1100 = vmatpush1.msra.mxu0 0.0
        %1101 = vmatprep.subr.mxu0 0.0
        %1102 = vmatpush1.msra.mxu0 0.0
        %1103 = vmatprep.subr.mxu0 0.0
        %1104 = vmatpush1.msra.mxu0 0.0
        %1105 = vmatprep.subr.mxu0 0.0
        %1106 = vmatpush1.msra.mxu0 0.0
        %1107 = vmatprep.subr.mxu0 0.0
        %1108 = vmatpush1.msra.mxu0 0.0
        %1109 = vmatprep.subr.mxu0 0.0
        %1110 = vmatpush1.msra.mxu0 0.0
        %1111 = vmatprep.subr.mxu0 0.0
        %1112 = vmatpush1.msra.mxu0 0.0
        %1113 = vmatprep.subr.mxu0 0.0
        %1114 = vmatpush1.msra.mxu0 0.0
        %1115 = vmatprep.subr.mxu0 0.0
        %1116 = vmatpush1.msra.mxu0 0.0
        %1117 = vmatprep.subr.mxu0 0.0
        %1118 = vmatpush1.msra.mxu0 0.0
        %1119 = vmatprep.subr.mxu0 0.0
        %1120 = vmatpush1.msra.mxu0 0.0
        %1121 = vmatprep.subr.mxu0 0.0
        %1122 = vmatpush1.msra.mxu0 0.0
        %1123 = vmatprep.subr.mxu0 0.0
        %1124 = vmatpush1.msra.mxu0 0.0
        %1125 = vmatprep.subr.mxu0 0.0
        %1126 = vmatpush1.msra.mxu0 0.0
        %1127 = vmatprep.subr.mxu0 0.0
        %1128 = vmatpush1.msra.mxu0 0.0
        %1129 = vmatprep.subr.mxu0 0.0
        %1130 = vmatpush1.msra.mxu0 0.0
        %1131 = vmatprep.subr.mxu0 0.0
        %1132 = vmatpush1.msra.mxu0 0.0
        %1133 = vmatprep.subr.mxu0 0.0
        %1134 = vmatpush1.msra.mxu0 0.0
        %1135 = vmatprep.subr.mxu0 0.0
        %1136 = vmatpush1.msra.mxu0 0.0
        %1137 = vmatprep.subr.mxu0 0.0
        %1138 = vmatpush1.msra.mxu0 0.0
        %1139 = vmatprep.subr.mxu0 0.0
        %1140 = vmatpush1.msra.mxu0 0.0
        %1141 = vmatprep.subr.mxu0 0.0
        %1142 = vmatpush1.msra.mxu0 0.0
        %1143 = vmatprep.subr.mxu0 0.0
        %1144 = vmatpush1.msra.mxu0 0.0
        %1145 = vmatprep.subr.mxu0 0.0
        %1146 = vmatpush1.msra.mxu0 0.0
        %1147 = vmatprep.mubr.f32.mxu0 0.0
        %1148 = vmatmul.mubr.f32.gmra.mrb[0].mxu0 %v1036
        %v1149 = vpop.f32.mrb[0].mxu0
        %v1150 = vadd.f32 %v1032, %v1149
        %v1151 = vpop.f32.mrb[0].mxu0
        %1152 = vmatprep.mubr.f32.mxu0 0.0
        %1153 = vmatmul.mubr.f32.gmra.mrb[0].mxu0 %v1039
        %v1154 = vpop.f32.mrb[0].mxu0
        %v1155 = vadd.f32 %v1032, %v1154
        %v1156 = vpop.f32.mrb[0].mxu0
        %1157 = vmatprep.mubr.f32.mxu0 0.0
        %1158 = vmatmul.mubr.f32.gmra.mrb[0].mxu0 %v1042
        %v1159 = vpop.f32.mrb[0].mxu0
        %v1160 = vadd.f32 %v1032, %v1159
        %v1161 = vpop.f32.mrb[0].mxu0
        %1162 = vmatprep.mubr.f32.mxu0 0.0
        %1163 = vmatmul.mubr.f32.gmra.mrb[0].mxu0 %v1045
        %v1164 = vpop.f32.mrb[0].mxu0
        %v1165 = vadd.f32 %v1032, %v1164
        %v1166 = vpop.f32.mrb[0].mxu0
        %1167 = vmatprep.mubr.f32.mxu0 0.0
        %1168 = vmatmul.mubr.f32.gmra.mrb[0].mxu0 %v1048
        %v1169 = vpop.f32.mrb[0].mxu0
        %v1170 = vadd.f32 %v1032, %v1169
        %v1171 = vpop.f32.mrb[0].mxu0
        %1172 = vmatprep.mubr.f32.mxu0 0.0
        %1173 = vmatmul.mubr.f32.gmra.mrb[0].mxu0 %v1051
        %v1174 = vpop.f32.mrb[0].mxu0
        %v1175 = vadd.f32 %v1032, %v1174
        %v1176 = vpop.f32.mrb[0].mxu0
        %1177 = vmatprep.mubr.f32.mxu0 0.0
        %1178 = vmatmul.mubr.f32.gmra.mrb[0].mxu0 %v1054
        %v1179 = vpop.f32.mrb[0].mxu0
        %v1180 = vadd.f32 %v1032, %v1179
        %v1181 = vpop.f32.mrb[0].mxu0
        %1182 = vmatprep.mubr.f32.mxu0 0.0
        %1183 = vmatmul.mubr.f32.gmra.mrb[0].mxu0 %v1057
        %v1184 = vpop.f32.mrb[0].mxu0
        %v1185 = vadd.f32 %v1032, %v1184
        %v1186 = vpop.f32.mrb[0].mxu0
        %1187 = vmatprep.mubr.f32.mxu0 0.0
        %1188 = vmatmul.mubr.f32.gmra.mrb[0].mxu0 %v1060
        %v1189 = vpop.f32.mrb[0].mxu0
        %v1190 = vadd.f32 %v1032, %v1189
        %v1191 = vpop.f32.mrb[0].mxu0
        %1192 = vmatprep.mubr.f32.mxu0 0.0
        %1193 = vmatmul.mubr.f32.gmra.mrb[0].mxu0 %v1063
        %v1194 = vpop.f32.mrb[0].mxu0
        %v1195 = vadd.f32 %v1032, %v1194
        %v1196 = vpop.f32.mrb[0].mxu0
        %1197 = vmatprep.mubr.f32.mxu0 0.0
        %1198 = vmatmul.mubr.f32.gmra.mrb[0].mxu0 %v1066
        %v1199 = vpop.f32.mrb[0].mxu0
        %v1200 = vadd.f32 %v1032, %v1199
        %v1201 = vpop.f32.mrb[0].mxu0
        %1202 = vmatprep.mubr.f32.mxu0 0.0
        %1203 = vmatmul.mubr.f32.gmra.mrb[0].mxu0 %v1069
        %v1204 = vpop.f32.mrb[0].mxu0
        %v1205 = vadd.f32 %v1032, %v1204
        %v1206 = vpop.f32.mrb[0].mxu0
        %1207 = vmatprep.mubr.f32.mxu0 0.0
        %1208 = vmatmul.mubr.f32.gmra.mrb[0].mxu0 %v1072
        %v1209 = vpop.f32.mrb[0].mxu0
        %v1210 = vadd.f32 %v1032, %v1209
        %v1211 = vpop.f32.mrb[0].mxu0
        %1212 = vmatprep.mubr.f32.mxu0 0.0
        %1213 = vmatmul.mubr.f32.gmra.mrb[0].mxu0 %v1075
        %v1214 = vpop.f32.mrb[0].mxu0
        %v1215 = vadd.f32 %v1032, %v1214
        %v1216 = vpop.f32.mrb[0].mxu0
        %1217 = vmatprep.mubr.f32.mxu0 0.0
        %1218 = vmatmul.mubr.f32.gmra.mrb[0].mxu0 %v1078
        %v1219 = vpop.f32.mrb[0].mxu0
        %v1220 = vadd.f32 %v1032, %v1219
        %v1221 = vpop.f32.mrb[0].mxu0
        %1222 = vmatprep.mubr.f32.mxu0 0.0
        %1223 = vmatmul.mubr.f32.gmra.mrb[0].mxu0 %v1081
        %v1224 = vpop.f32.mrb[0].mxu0
        %v1225 = vadd.f32 %v1032, %v1224
        %v1226 = vpop.f32.mrb[0].mxu0
        %1227 = vdwg.mxu0
        %v1228 = vmax.f32 %v1150, 0.0
        %v1229 = vmax.f32 %v1155, 0.0
        %v1230 = vmax.f32 %v1160, 0.0
        %v1231 = vmax.f32 %v1165, 0.0
        %v1232 = vmax.f32 %v1170, 0.0
        %v1233 = vmax.f32 %v1175, 0.0
        %v1234 = vmax.f32 %v1180, 0.0
        %v1235 = vmax.f32 %v1185, 0.0
        %v1236 = vmax.f32 %v1190, 0.0
        %v1237 = vmax.f32 %v1195, 0.0
        %v1238 = vmax.f32 %v1200, 0.0
        %v1239 = vmax.f32 %v1205, 0.0
        %v1240 = vmax.f32 %v1210, 0.0
        %v1241 = vmax.f32 %v1215, 0.0
        %v1242 = vmax.f32 %v1220, 0.0
        %v1243 = vmax.f32 %v1225, 0.0
        %v1244 = vld [vmem:[%s5] sm:$0xff]
        %v1245 = vld [vmem:[%s5 + $0x8] sm:$0xff]
        %v1246 = vld [vmem:[%s5 + $0x10] sm:$0xff]
        %v1247 = vld [vmem:[%s5 + $0x18] sm:$0xff]
        %v1248 = vld [vmem:[%s6] sm:$0x1]
        %v1250 = vlaneseq
        %v1251 = vshrl.u32 %v1250, 7
        %v1252 = vsub.s32 0, %v1251
        %v1253 = vrot.slane %v1248, %v1252
        %v1256 = vsel %vm1034, %v1228, 0
        %v1259 = vsel %vm1034, %v1229, 0
        %v1262 = vsel %vm1034, %v1230, 0
        %v1265 = vsel %vm1034, %v1231, 0
        %v1268 = vsel %vm1034, %v1232, 0
        %v1271 = vsel %vm1034, %v1233, 0
        %v1274 = vsel %vm1034, %v1234, 0
        %v1277 = vsel %vm1034, %v1235, 0
        %v1280 = vsel %vm1034, %v1236, 0
        %v1283 = vsel %vm1034, %v1237, 0
        %v1286 = vsel %vm1034, %v1238, 0
        %v1289 = vsel %vm1034, %v1239, 0
        %v1292 = vsel %vm1034, %v1240, 0
        %v1295 = vsel %vm1034, %v1241, 0
        %v1298 = vsel %vm1034, %v1242, 0
        %v1301 = vsel %vm1034, %v1243, 0
        %1303 = vmatprep.subr.mxu0 0.0
        %1304 = vmatpush1.msra.mxu0 %v1244
        %1305 = vmatprep.subr.mxu0 0.0
        %1306 = vmatpush1.msra.mxu0 %v1245
        %1307 = vmatprep.subr.mxu0 0.0
        %1308 = vmatpush1.msra.mxu0 %v1246
        %1309 = vmatprep.subr.mxu0 0.0
        %1310 = vmatpush1.msra.mxu0 %v1247
        %1311 = vmatprep.subr.mxu0 0.0
        %1312 = vmatpush1.msra.mxu0 0.0
        %1313 = vmatprep.subr.mxu0 0.0
        %1314 = vmatpush1.msra.mxu0 0.0
        %1315 = vmatprep.subr.mxu0 0.0
        %1316 = vmatpush1.msra.mxu0 0.0
        %1317 = vmatprep.subr.mxu0 0.0
        %1318 = vmatpush1.msra.mxu0 0.0
        %1319 = vmatprep.subr.mxu0 0.0
        %1320 = vmatpush1.msra.mxu0 0.0
        %1321 = vmatprep.subr.mxu0 0.0
        %1322 = vmatpush1.msra.mxu0 0.0
        %1323 = vmatprep.subr.mxu0 0.0
        %1324 = vmatpush1.msra.mxu0 0.0
        %1325 = vmatprep.subr.mxu0 0.0
        %1326 = vmatpush1.msra.mxu0 0.0
        %1327 = vmatprep.subr.mxu0 0.0
        %1328 = vmatpush1.msra.mxu0 0.0
        %1329 = vmatprep.subr.mxu0 0.0
        %1330 = vmatpush1.msra.mxu0 0.0
        %1331 = vmatprep.subr.mxu0 0.0
        %1332 = vmatpush1.msra.mxu0 0.0
        %1333 = vmatprep.subr.mxu0 0.0
        %1334 = vmatpush1.msra.mxu0 0.0
        %1335 = vmatprep.subr.mxu0 0.0
        %1336 = vmatpush1.msra.mxu0 0.0
        %1337 = vmatprep.subr.mxu0 0.0
        %1338 = vmatpush1.msra.mxu0 0.0
        %1339 = vmatprep.subr.mxu0 0.0
        %1340 = vmatpush1.msra.mxu0 0.0
        %1341 = vmatprep.subr.mxu0 0.0
        %1342 = vmatpush1.msra.mxu0 0.0
        %1343 = vmatprep.subr.mxu0 0.0
        %1344 = vmatpush1.msra.mxu0 0.0
        %1345 = vmatprep.subr.mxu0 0.0
        %1346 = vmatpush1.msra.mxu0 0.0
        %1347 = vmatprep.subr.mxu0 0.0
        %1348 = vmatpush1.msra.mxu0 0.0
        %1349 = vmatprep.subr.mxu0 0.0
        %1350 = vmatpush1.msra.mxu0 0.0
        %1351 = vmatprep.subr.mxu0 0.0
        %1352 = vmatpush1.msra.mxu0 0.0
        %1353 = vmatprep.subr.mxu0 0.0
        %1354 = vmatpush1.msra.mxu0 0.0
        %1355 = vmatprep.subr.mxu0 0.0
        %1356 = vmatpush1.msra.mxu0 0.0
        %1357 = vmatprep.subr.mxu0 0.0
        %1358 = vmatpush1.msra.mxu0 0.0
        %1359 = vmatprep.subr.mxu0 0.0
        %1360 = vmatpush1.msra.mxu0 0.0
        %1361 = vmatprep.subr.mxu0 0.0
        %1362 = vmatpush1.msra.mxu0 0.0
        %1363 = vmatprep.subr.mxu0 0.0
        %1364 = vmatpush1.msra.mxu0 0.0
        %1365 = vmatprep.subr.mxu0 0.0
        %1366 = vmatpush1.msra.mxu0 0.0
        %1367 = vmatprep.mubr.f32.mxu0 0.0
        %1368 = vmatmul.mubr.f32.gmra.mrb[0].mxu0 %v1256
        %v1369 = vpop.f32.mrb[0].mxu0
        %v1370 = vadd.f32 %v1253, %v1369
        %v1371 = vpop.f32.mrb[0].mxu0
        %1372 = vmatprep.mubr.f32.mxu0 0.0
        %1373 = vmatmul.mubr.f32.gmra.mrb[0].mxu0 %v1259
        %v1374 = vpop.f32.mrb[0].mxu0
        %v1375 = vadd.f32 %v1253, %v1374
        %v1376 = vpop.f32.mrb[0].mxu0
        %1377 = vmatprep.mubr.f32.mxu0 0.0
        %1378 = vmatmul.mubr.f32.gmra.mrb[0].mxu0 %v1262
        %v1379 = vpop.f32.mrb[0].mxu0
        %v1380 = vadd.f32 %v1253, %v1379
        %v1381 = vpop.f32.mrb[0].mxu0
        %1382 = vmatprep.mubr.f32.mxu0 0.0
        %1383 = vmatmul.mubr.f32.gmra.mrb[0].mxu0 %v1265
        %v1384 = vpop.f32.mrb[0].mxu0
        %v1385 = vadd.f32 %v1253, %v1384
        %v1386 = vpop.f32.mrb[0].mxu0
        %1387 = vmatprep.mubr.f32.mxu0 0.0
        %1388 = vmatmul.mubr.f32.gmra.mrb[0].mxu0 %v1268
        %v1389 = vpop.f32.mrb[0].mxu0
        %v1390 = vadd.f32 %v1253, %v1389
        %v1391 = vpop.f32.mrb[0].mxu0
        %1392 = vmatprep.mubr.f32.mxu0 0.0
        %1393 = vmatmul.mubr.f32.gmra.mrb[0].mxu0 %v1271
        %v1394 = vpop.f32.mrb[0].mxu0
        %v1395 = vadd.f32 %v1253, %v1394
        %v1396 = vpop.f32.mrb[0].mxu0
        %1397 = vmatprep.mubr.f32.mxu0 0.0
        %1398 = vmatmul.mubr.f32.gmra.mrb[0].mxu0 %v1274
        %v1399 = vpop.f32.mrb[0].mxu0
        %v1400 = vadd.f32 %v1253, %v1399
        %v1401 = vpop.f32.mrb[0].mxu0
        %1402 = vmatprep.mubr.f32.mxu0 0.0
        %1403 = vmatmul.mubr.f32.gmra.mrb[0].mxu0 %v1277
        %v1404 = vpop.f32.mrb[0].mxu0
        %v1405 = vadd.f32 %v1253, %v1404
        %v1406 = vpop.f32.mrb[0].mxu0
        %1407 = vmatprep.mubr.f32.mxu0 0.0
        %1408 = vmatmul.mubr.f32.gmra.mrb[0].mxu0 %v1280
        %v1409 = vpop.f32.mrb[0].mxu0
        %v1410 = vadd.f32 %v1253, %v1409
        %v1411 = vpop.f32.mrb[0].mxu0
        %1412 = vmatprep.mubr.f32.mxu0 0.0
        %1413 = vmatmul.mubr.f32.gmra.mrb[0].mxu0 %v1283
        %v1414 = vpop.f32.mrb[0].mxu0
        %v1415 = vadd.f32 %v1253, %v1414
        %v1416 = vpop.f32.mrb[0].mxu0
        %1417 = vmatprep.mubr.f32.mxu0 0.0
        %1418 = vmatmul.mubr.f32.gmra.mrb[0].mxu0 %v1286
        %v1419 = vpop.f32.mrb[0].mxu0
        %v1420 = vadd.f32 %v1253, %v1419
        %v1421 = vpop.f32.mrb[0].mxu0
        %1422 = vmatprep.mubr.f32.mxu0 0.0
        %1423 = vmatmul.mubr.f32.gmra.mrb[0].mxu0 %v1289
        %v1424 = vpop.f32.mrb[0].mxu0
        %v1425 = vadd.f32 %v1253, %v1424
        %v1426 = vpop.f32.mrb[0].mxu0
        %1427 = vmatprep.mubr.f32.mxu0 0.0
        %1428 = vmatmul.mubr.f32.gmra.mrb[0].mxu0 %v1292
        %v1429 = vpop.f32.mrb[0].mxu0
        %v1430 = vadd.f32 %v1253, %v1429
        %v1431 = vpop.f32.mrb[0].mxu0
        %1432 = vmatprep.mubr.f32.mxu0 0.0
        %1433 = vmatmul.mubr.f32.gmra.mrb[0].mxu0 %v1295
        %v1434 = vpop.f32.mrb[0].mxu0
        %v1435 = vadd.f32 %v1253, %v1434
        %v1436 = vpop.f32.mrb[0].mxu0
        %1437 = vmatprep.mubr.f32.mxu0 0.0
        %1438 = vmatmul.mubr.f32.gmra.mrb[0].mxu0 %v1298
        %v1439 = vpop.f32.mrb[0].mxu0
        %v1440 = vadd.f32 %v1253, %v1439
        %v1441 = vpop.f32.mrb[0].mxu0
        %1442 = vmatprep.mubr.f32.mxu0 0.0
        %1443 = vmatmul.mubr.f32.gmra.mrb[0].mxu0 %v1301
        %v1444 = vpop.f32.mrb[0].mxu0
        %v1445 = vadd.f32 %v1253, %v1444
        %v1446 = vpop.f32.mrb[0].mxu0
        %1447 = vdwg.mxu0
        %1448 = vst [vmem:[%s390] sm:$0xff] %v1370
        %1449 = vst [vmem:[%s390 + $0x8] sm:$0xff] %v1375
        %1450 = vst [vmem:[%s390 + $0x10] sm:$0xff] %v1380
        %1451 = vst [vmem:[%s390 + $0x18] sm:$0xff] %v1385
        %1452 = vst [vmem:[%s390 + $0x20] sm:$0xff] %v1390
        %1453 = vst [vmem:[%s390 + $0x28] sm:$0xff] %v1395
        %1454 = vst [vmem:[%s390 + $0x30] sm:$0xff] %v1400
        %1455 = vst [vmem:[%s390 + $0x38] sm:$0xff] %v1405
        %1456 = vst [vmem:[%s390 + $0x40] sm:$0xff] %v1410
        %1457 = vst [vmem:[%s390 + $0x48] sm:$0xff] %v1415
        %1458 = vst [vmem:[%s390 + $0x50] sm:$0xff] %v1420
        %1459 = vst [vmem:[%s390 + $0x58] sm:$0xff] %v1425
        %1460 = vst [vmem:[%s390 + $0x60] sm:$0xff] %v1430
        %1461 = vst [vmem:[%s390 + $0x68] sm:$0xff] %v1435
        %1462 = vst [vmem:[%s390 + $0x70] sm:$0xff] %v1440
        %1463 = vst [vmem:[%s390 + $0x78] sm:$0xff] %v1445
      $region56: #{_extract_pair.1} parent=47 // pred_fallthru
        _
      %s1464 = smul.u32 16, %s24
      %p1465 = scmp.lt.s32.totalorder %s23, 3
      %s1466 = scalar_select %p1465, %s23, 3
      %p1467 = scmp.lt.s32.totalorder %s1464, 63
      %s1468 = scalar_select %p1467, %s1464, 63
      %s1469 = smul.addr %s1466, 64
      %s1470 = sadd.s32 %s1468, %s1469
      %s1471 = smul.addr %s1470, 8
      %s1472 = scalar_lea.vmem %s7, %s1471
      // Predicated region
      $region57: #{_extract_pair.1} parent=47 // pred_check
        %p1473 = pneg %p225
      $region58: #{_extract_pair.1} parent=47 // pred_check_branch
        %1475 = sbr.rel (%p1473) target = $region60
      $region59: #{_extract_pair.1} parent=47 // pred_region
        %s1476 = smul.u32 16, %s24
      $region60: #{_extract_pair.1} parent=47 // pred_fallthru
        _
    $region48: #{_extract_pair.1} parent=5 // pred_fallthru
      _
    %p1477 = scmp.le.s32.totalorder 2, %s13
    // Predicated region
    $region61: #{_extract_pair.1} parent=5 // pred_check
      %p1478 = pneg %p1477
    $region62: #{_extract_pair.1} parent=5 // pred_check_branch
      %1480 = sbr.rel (%p1478) target = $region64
    $region63: #{_extract_pair.1} parent=5 // pred_region
      %s1481 = ssub.s32 %s13, 2
      // Predicated region
      $region65: #{_extract_pair.1} parent=63 // pred_check
        %p1482 = pneg %p231
      $region66: #{_extract_pair.1} parent=63 // pred_check_branch
        %1484 = sbr.rel (%p1482) target = $region68
      $region67: #{_extract_pair.1} parent=63 // pred_region
        %s1485 = smul.u32 16, %s27
        %p1486 = scmp.lt.s32.totalorder %s26, 3
        %s1487 = scalar_select %p1486, %s26, 3
        %p1488 = scmp.lt.s32.totalorder %s1485, 63
        %s1489 = scalar_select %p1488, %s1485, 63
        %s1490 = smul.addr %s1487, 64
        %s1491 = sadd.s32 %s1489, %s1490
        %s1492 = smul.addr %s1491, 8
        %s1493 = scalar_lea.vmem %s7, %s1492
      $region68: #{_extract_pair.1} parent=63 // pred_fallthru
        _
    $region64: #{_extract_pair.1} parent=5 // pred_fallthru
      _
  $region6: #{_extract_pair.1} parent=0 // loop_footer
    %s17 = sadd.s32 1, %s13
  $region7: #{_extract_pair.1} parent=0 // loop_footer_branch
    %12 = sbr.rel target = $region3
  $region8: #{_extract_pair.1} parent=0 // loop_exit
    _

</llo_original>
